<compile_context>
chip_gen: v7x
topology: tpu7x:2x2x1
jax: 0.10.0
libtpu: 0.0.40
codegen_flags: <defaults>
</compile_context>

<pallas_src>
import math

import jax
import jax.numpy as jnp
from jax import lax
from jax.experimental import pallas as pl
from jax.experimental.pallas import tpu as pltpu


# ----------------------------- hyperparameters (hp) -----------------------------
class hp:
    vocab_size = 32
    charactor_embedding_size = 32      # E
    speaker_size = 4                   # != 1 -> multi-speaker path is active
    speaker_embedding = 16             # S
    encoder_conv_channels = 64         # C
    encoder_conv_width = 3
    encoder_dilation_base = 2
    encoder_layer_size = 4
    pad_id = 0                         # hp.vocab_to_id['\x00']


def conv_layer_specs():
    """Static per-layer spec: (kernel_size, Cin, Cout, dilation, relu)."""
    E = hp.charactor_embedding_size
    C = hp.encoder_conv_channels
    specs = [(1, E, C, 1, True)]
    for i in range(hp.encoder_layer_size):
        specs.append((hp.encoder_conv_width, C, C,
                      hp.encoder_dilation_base ** (i % 4), False))
    specs.append((1, C, E, 1, True))
    return tuple(specs)


# ----------------------------- fused Pallas kernel -------------------------------
def make_encoder_kernel(layer_specs, T, E, V):
    n_layers = len(layer_specs)
    scale = 0.5 ** 0.5

    # Zero-halo row shifts for the dilated "same" conv taps.
    #   shift_down(x, d)[t] = x[t-d] (0 for t <  d)   -> tap k=0
    #   shift_up(x, d)[t]   = x[t+d] (0 for t >= T-d) -> tap k=2
    def shift_down(x, d):
        z = jnp.zeros((d,) + x.shape[1:], x.dtype)
        return jnp.concatenate([z, x[: x.shape[0] - d]], axis=0)

    def shift_up(x, d):
        z = jnp.zeros((d,) + x.shape[1:], x.dtype)
        return jnp.concatenate([x[d:], z], axis=0)

    def kernel(*refs):
        ids_ref, emb_ref, spk_ref, fc1w_ref, fc1b_ref = refs[0:5]
        conv_refs = refs[5:5 + 2 * n_layers]           # (w_flat bf16, bias f32) per layer
        keys_ref = refs[5 + 2 * n_layers]
        values_ref = refs[6 + 2 * n_layers]

        # ---- fused embedding gather: one-hot (T, V) @ table (V, E) on the MXU.
        # Selectors are exactly 0/1 so the f32 matmul reproduces the gather exactly
        # (padding row is zero in the table).
        ids = ids_ref[...]                                        # (T, 1) int32
        vocab_iota = lax.broadcasted_iota(jnp.int32, (T, V), 1)
        onehot = (vocab_iota == ids).astype(jnp.float32)          # (T, V)
        embedded = jnp.dot(onehot, emb_ref[...],
                           preferred_element_type=jnp.float32)    # (T, E) f32

        # ---- speaker FC1 (+softsign): bf16 operands, f32 accumulate/elementwise --
        spk = spk_ref[0]                                          # (1, S) f32
        s1 = jnp.dot(spk.astype(jnp.bfloat16), fc1w_ref[...],
                     preferred_element_type=jnp.float32) + fc1b_ref[...]
        s1 = s1 / (1.0 + jnp.abs(s1))                             # softsign, (1, E) f32

        embedded = embedded + s1                                  # matches torch in-place +=
        x = embedded                                              # (T, E) f32

        # ---- conv stack: each layer is ONE bf16 MXU matmul ----
        for li, (kz, cin, cout, dil, relu) in enumerate(layer_specs):
            w_ref = conv_refs[2 * li]                             # (kz*cin, cout) bf16
            b_ref = conv_refs[2 * li + 1]                         # (1, cout) f32
            if kz == 1:
                unf = x
            else:
                # Merged 3-tap unfold: [x[t-d], x[t], x[t+d]] -> (T, 3*cin), so the
                # whole dilated layer is a single K = 3*cin MXU pass (1 pass on
                # v6e/v7x, 2 on v5e) instead of 3 per-tap dots.
                unf = jnp.concatenate(
                    [shift_down(x, dil), x, shift_up(x, dil)], axis=-1)
            y = jnp.dot(unf.astype(jnp.bfloat16), w_ref[...],
                        preferred_element_type=jnp.float32)
            y = y + b_ref[...]
            if relu:
                y = jnp.maximum(y, 0.0)
            x = y                                                 # (T, cout) f32

        # ---- speaker add #2: softsign(speaker_out1) (reproduces module bug) ----
        s2 = s1 / (1.0 + jnp.abs(s1))
        xk = x + s2                                               # (T, E) f32

        keys_ref[0] = xk
        values_ref[0] = (xk + embedded) * scale

    return kernel


# ----------------------------- parameter init -----------------------------------
def init_params(key):
    E = hp.charactor_embedding_size
    S = hp.speaker_embedding

    k_emb, k_fc1, k_fc2, k_conv = jax.random.split(key, 4)

    emb = jax.random.normal(k_emb, (hp.vocab_size, E), jnp.float32)
    emb = emb.at[hp.pad_id].set(0.0)                   # padding_idx row is zero

    def linear(k, fin, fout):
        kw, kb = jax.random.split(k)
        w = jax.random.normal(kw, (fin, fout), jnp.float32) / math.sqrt(fin)
        b = jax.random.normal(kb, (fout,), jnp.float32) * 0.01
        return w, b

    convs = []
    ck = k_conv
    for (kz, cin, cout, _dil, _relu) in conv_layer_specs():
        ck, kw, kb = jax.random.split(ck, 3)
        w = jax.random.normal(kw, (kz, cin, cout), jnp.float32) / math.sqrt(cin * kz)
        b = jax.random.normal(kb, (cout,), jnp.float32) * 0.01
        convs.append((w, b))

    return {
        "embedding": emb,
        "fc1": linear(k_fc1, S, E),
        # fc_speaker2 exists in the module but its output is discarded by the
        # original-module bug; kept for parameter parity, never computed.
        "fc2": linear(k_fc2, S, E),
        "convs": convs,
    }


# ----------------------------- Encoder forward -----------------------------------
def encoder_forward(params, input_ids, speaker_embedding):
    B, T = input_ids.shape
    E = hp.charactor_embedding_size
    V = hp.vocab_size
    S = hp.speaker_embedding
    assert T % 8 == 0, "sequence length must be a multiple of 8 (sublane tiling)"

    layer_specs = conv_layer_specs()
    fc1_w, fc1_b = params["fc1"]

    # Flatten conv weights (kz*Cin, Cout) and pre-cast to bf16 once; biases stay f32.
    flat_conv = []
    conv_specs = []
    for (w, b), (kz, cin, cout, _dil, _relu) in zip(params["convs"], layer_specs):
        flat_conv.append(w.reshape(kz * cin, cout).astype(jnp.bfloat16))
        flat_conv.append(b.reshape(1, cout).astype(jnp.float32))
        conv_specs.append(pl.BlockSpec((kz * cin, cout), lambda b_: (0, 0)))
        conv_specs.append(pl.BlockSpec((1, cout), lambda b_: (0, 0)))

    ids2d = input_ids.reshape(B * T, 1).astype(jnp.int32)          # (B*T, 1)
    spk3d = speaker_embedding.reshape(B, 1, S).astype(jnp.float32)  # (B, 1, S)

    kernel = make_encoder_kernel(layer_specs, T, E, V)

    grid_spec = pltpu.PrefetchScalarGridSpec(
        num_scalar_prefetch=0,
        grid=(B,),                                                  # one batch element per step
        in_specs=[
            pl.BlockSpec((T, 1), lambda b_: (b_, 0)),               # ids for this batch element
            pl.BlockSpec((V, E), lambda b_: (0, 0)),                # embedding table (f32)
            pl.BlockSpec((1, 1, S), lambda b_: (b_, 0, 0)),         # speaker embedding row
            pl.BlockSpec((S, E), lambda b_: (0, 0)),                # fc1 weight (bf16)
            pl.BlockSpec((1, E), lambda b_: (0, 0)),                # fc1 bias (f32)
            *conv_specs,
        ],
        out_specs=[
            pl.BlockSpec((1, T, E), lambda b_: (b_, 0, 0)),
            pl.BlockSpec((1, T, E), lambda b_: (b_, 0, 0)),
        ],
    )

    keys, values = pl.pallas_call(
        kernel,
        grid_spec=grid_spec,
        out_shape=(jax.ShapeDtypeStruct((B, T, E), jnp.float32),
                   jax.ShapeDtypeStruct((B, T, E), jnp.float32)),
        compiler_params=pltpu.CompilerParams(
            dimension_semantics=("parallel",),        # v7x: both TensorCores used
            vmem_limit_bytes=32 * 1024 * 1024),       # tiny residency; safe on all gens
    )(ids2d, params["embedding"].astype(jnp.float32), spk3d,
      fc1_w.astype(jnp.bfloat16), fc1_b.reshape(1, E).astype(jnp.float32),
      *flat_conv)

    return keys, values


# ----------------------------- pure-JAX reference --------------------------------
def reference_forward(params, input_ids, speaker_embedding):
    """Same simplified model, plain XLA, same bf16-operand / f32-accum strategy."""
    embedded = jnp.take(params["embedding"], input_ids, axis=0)       # (B, T, E)
    w1, b1 = params["fc1"]
    s1 = jnp.dot(speaker_embedding.astype(jnp.bfloat16), w1.astype(jnp.bfloat16),
                 preferred_element_type=jnp.float32) + b1[None, :]
    s1 = s1 / (1.0 + jnp.abs(s1))
    embedded = embedded + s1[:, None, :]
    x = embedded
    for (w, b), (kz, cin, cout, dil, relu) in zip(params["convs"], conv_layer_specs()):
        wf = w.reshape(kz * cin, cout).astype(jnp.bfloat16)
        if kz == 1:
            unf = x
        else:
            T = x.shape[1]
            xp = jnp.pad(x, ((0, 0), (dil, dil), (0, 0)))
            unf = jnp.concatenate(
                [xp[:, k * dil: k * dil + T, :] for k in range(kz)], axis=-1)
        y = jnp.dot(unf.astype(jnp.bfloat16), wf, preferred_element_type=jnp.float32)
        y = y + b[None, None, :]
        if relu:
            y = jnp.maximum(y, 0.0)
        x = y
    s2 = s1 / (1.0 + jnp.abs(s1))
    xk = x + s2[:, None, :]
    return xk, (xk + embedded) * (0.5 ** 0.5)


# ----------------------------- main ----------------------------------------------
if __name__ == "__main__":
    key = jax.random.PRNGKey(0)
    k_params, k_ids, k_spk = jax.random.split(key, 3)

    params = init_params(k_params)

    B, T = 2, 16
    input_ids = jax.random.randint(k_ids, (B, T), 0, hp.vocab_size, dtype=jnp.int32)
    speaker_embedding = jax.random.normal(k_spk, (B, hp.speaker_embedding), jnp.float32)

    fwd = jax.jit(encoder_forward)
    keys, values = fwd(params, input_ids, speaker_embedding)
    jax.block_until_ready((keys, values))

    ref_keys, ref_values = jax.jit(reference_forward)(params, input_ids, speaker_embedding)
    jax.block_until_ready((ref_keys, ref_values))

    assert keys.shape == (B, T, hp.charactor_embedding_size)
    assert values.shape == (B, T, hp.charactor_embedding_size)
    assert bool(jnp.all(jnp.isfinite(keys))) and bool(jnp.all(jnp.isfinite(values)))
    assert bool(jnp.allclose(keys, ref_keys, atol=5e-3, rtol=5e-3))
    assert bool(jnp.allclose(values, ref_values, atol=5e-3, rtol=5e-3))
    print("KERNEL_OK")
</pallas_src>

<mosaic_0001>
module attributes {stable_mosaic.version = 11 : i64} {
  func.func @kernel(%arg0: i32, %arg1: memref<16x1xi32, #tpu.memory_space<vmem>>, %arg2: memref<32x32xf32, #tpu.memory_space<vmem>>, %arg3: memref<1x1x16xf32, #tpu.memory_space<vmem>>, %arg4: memref<16x32xbf16, #tpu.memory_space<vmem>>, %arg5: memref<1x32xf32, #tpu.memory_space<vmem>>, %arg6: memref<32x64xbf16, #tpu.memory_space<vmem>>, %arg7: memref<1x64xf32, #tpu.memory_space<vmem>>, %arg8: memref<192x64xbf16, #tpu.memory_space<vmem>>, %arg9: memref<1x64xf32, #tpu.memory_space<vmem>>, %arg10: memref<192x64xbf16, #tpu.memory_space<vmem>>, %arg11: memref<1x64xf32, #tpu.memory_space<vmem>>, %arg12: memref<192x64xbf16, #tpu.memory_space<vmem>>, %arg13: memref<1x64xf32, #tpu.memory_space<vmem>>, %arg14: memref<192x64xbf16, #tpu.memory_space<vmem>>, %arg15: memref<1x64xf32, #tpu.memory_space<vmem>>, %arg16: memref<64x32xbf16, #tpu.memory_space<vmem>>, %arg17: memref<1x32xf32, #tpu.memory_space<vmem>>, %arg18: memref<1x16x32xf32, #tpu.memory_space<vmem>>, %arg19: memref<1x16x32xf32, #tpu.memory_space<vmem>>) attributes {dimension_semantics = [#tpu.dimension_semantics<parallel>], iteration_bounds = array<i64: 2>, scalar_prefetch = 0 : i64, scratch_operands = 0 : i64, tpu.core_type = #tpu.core_type<tc>, window_params = [{transform_indices = @transform_0, window_bounds = array<i64: 16, 1>}, {pipeline_mode = #tpu.pipeline_mode<synchronous>, transform_indices = @transform_1, window_bounds = array<i64: 32, 32>}, {transform_indices = @transform_2, window_bounds = array<i64: 1, 1, 16>}, {pipeline_mode = #tpu.pipeline_mode<synchronous>, transform_indices = @transform_3, window_bounds = array<i64: 16, 32>}, {pipeline_mode = #tpu.pipeline_mode<synchronous>, transform_indices = @transform_4, window_bounds = array<i64: 1, 32>}, {pipeline_mode = #tpu.pipeline_mode<synchronous>, transform_indices = @transform_5, window_bounds = array<i64: 32, 64>}, {pipeline_mode = #tpu.pipeline_mode<synchronous>, transform_indices = @transform_6, window_bounds = array<i64: 1, 64>}, {pipeline_mode = #tpu.pipeline_mode<synchronous>, transform_indices = @transform_7, window_bounds = array<i64: 192, 64>}, {pipeline_mode = #tpu.pipeline_mode<synchronous>, transform_indices = @transform_8, window_bounds = array<i64: 1, 64>}, {pipeline_mode = #tpu.pipeline_mode<synchronous>, transform_indices = @transform_9, window_bounds = array<i64: 192, 64>}, {pipeline_mode = #tpu.pipeline_mode<synchronous>, transform_indices = @transform_10, window_bounds = array<i64: 1, 64>}, {pipeline_mode = #tpu.pipeline_mode<synchronous>, transform_indices = @transform_11, window_bounds = array<i64: 192, 64>}, {pipeline_mode = #tpu.pipeline_mode<synchronous>, transform_indices = @transform_12, window_bounds = array<i64: 1, 64>}, {pipeline_mode = #tpu.pipeline_mode<synchronous>, transform_indices = @transform_13, window_bounds = array<i64: 192, 64>}, {pipeline_mode = #tpu.pipeline_mode<synchronous>, transform_indices = @transform_14, window_bounds = array<i64: 1, 64>}, {pipeline_mode = #tpu.pipeline_mode<synchronous>, transform_indices = @transform_15, window_bounds = array<i64: 64, 32>}, {pipeline_mode = #tpu.pipeline_mode<synchronous>, transform_indices = @transform_16, window_bounds = array<i64: 1, 32>}, {transform_indices = @transform_17, window_bounds = array<i64: 1, 16, 32>}, {transform_indices = @transform_18, window_bounds = array<i64: 1, 16, 32>}]} {
    %c0 = arith.constant 0 : index
    %c0_0 = arith.constant 0 : index
    %0 = vector.load %arg1[%c0, %c0_0] : memref<16x1xi32, #tpu.memory_space<vmem>>, vector<16x1xi32>
    %1 = tpu.iota {dimensions = array<i32: 1>} : vector<16x32xi32>
    %2 = vector.broadcast %0 : vector<16x1xi32> to vector<16x32xi32>
    %3 = arith.cmpi eq, %1, %2 : vector<16x32xi32>
    %4 = arith.extui %3 : vector<16x32xi1> to vector<16x32xi32>
    %5 = arith.sitofp %4 : vector<16x32xi32> to vector<16x32xf32>
    %c0_1 = arith.constant 0 : index
    %c0_2 = arith.constant 0 : index
    %6 = vector.load %arg2[%c0_1, %c0_2] : memref<32x32xf32, #tpu.memory_space<vmem>>, vector<32x32xf32>
    %cst = arith.constant dense<0.000000e+00> : vector<16x32xf32>
    %7 = tpu.matmul %5, %6, %cst {dimension_numbers = #tpu.dot_dimension_numbers<[1], [0], [0], [1], [0, 0, 1, 1], [], []>} : vector<16x32xf32>, vector<32x32xf32>, vector<16x32xf32> -> vector<16x32xf32>
    %c0_3 = arith.constant 0 : index
    %c0_4 = arith.constant 0 : index
    %c0_5 = arith.constant 0 : index
    %8 = vector.load %arg3[%c0_3, %c0_4, %c0_5] : memref<1x1x16xf32, #tpu.memory_space<vmem>>, vector<1x1x16xf32>
    %9 = vector.shape_cast %8 : vector<1x1x16xf32> to vector<1x16xf32>
    %10 = arith.truncf %9 : vector<1x16xf32> to vector<1x16xbf16>
    %c0_6 = arith.constant 0 : index
    %c0_7 = arith.constant 0 : index
    %11 = vector.load %arg4[%c0_6, %c0_7] : memref<16x32xbf16, #tpu.memory_space<vmem>>, vector<16x32xbf16>
    %cst_8 = arith.constant dense<0.000000e+00> : vector<1x32xf32>
    %12 = tpu.matmul %10, %11, %cst_8 {dimension_numbers = #tpu.dot_dimension_numbers<[1], [0], [0], [1], [0, 0, 1, 1], [], []>} : vector<1x16xbf16>, vector<16x32xbf16>, vector<1x32xf32> -> vector<1x32xf32>
    %c0_9 = arith.constant 0 : index
    %c0_10 = arith.constant 0 : index
    %13 = vector.load %arg5[%c0_9, %c0_10] : memref<1x32xf32, #tpu.memory_space<vmem>>, vector<1x32xf32>
    %14 = arith.addf %12, %13 : vector<1x32xf32>
    %15 = math.absf %14 : vector<1x32xf32>
    %cst_11 = arith.constant 1.000000e+00 : f32
    %16 = vector.broadcast %cst_11 : f32 to vector<1x32xf32>
    %17 = arith.addf %16, %15 : vector<1x32xf32>
    %18 = arith.divf %14, %17 : vector<1x32xf32>
    %19 = vector.broadcast %18 : vector<1x32xf32> to vector<16x32xf32>
    %20 = arith.addf %7, %19 : vector<16x32xf32>
    %21 = arith.truncf %20 : vector<16x32xf32> to vector<16x32xbf16>
    %c0_12 = arith.constant 0 : index
    %c0_13 = arith.constant 0 : index
    %22 = vector.load %arg6[%c0_12, %c0_13] : memref<32x64xbf16, #tpu.memory_space<vmem>>, vector<32x64xbf16>
    %cst_14 = arith.constant dense<0.000000e+00> : vector<16x64xf32>
    %23 = tpu.matmul %21, %22, %cst_14 {dimension_numbers = #tpu.dot_dimension_numbers<[1], [0], [0], [1], [0, 0, 1, 1], [], []>} : vector<16x32xbf16>, vector<32x64xbf16>, vector<16x64xf32> -> vector<16x64xf32>
    %c0_15 = arith.constant 0 : index
    %c0_16 = arith.constant 0 : index
    %24 = vector.load %arg7[%c0_15, %c0_16] : memref<1x64xf32, #tpu.memory_space<vmem>>, vector<1x64xf32>
    %25 = vector.broadcast %24 : vector<1x64xf32> to vector<16x64xf32>
    %26 = arith.addf %23, %25 : vector<16x64xf32>
    %cst_17 = arith.constant 0.000000e+00 : f32
    %27 = vector.broadcast %cst_17 : f32 to vector<16x64xf32>
    %28 = arith.maximumf %26, %27 : vector<16x64xf32>
    %cst_18 = arith.constant 0.000000e+00 : f32
    %29 = vector.broadcast %cst_18 : f32 to vector<1x64xf32>
    %30 = vector.extract_strided_slice %28 {offsets = [0, 0], sizes = [15, 64], strides = [1, 1]} : vector<16x64xf32> to vector<15x64xf32>
    %31 = tpu.concatenate %29, %30 in 0 : vector<1x64xf32>, vector<15x64xf32> -> vector<16x64xf32>
    %cst_19 = arith.constant 0.000000e+00 : f32
    %32 = vector.broadcast %cst_19 : f32 to vector<1x64xf32>
    %33 = vector.extract_strided_slice %28 {offsets = [1, 0], sizes = [15, 64], strides = [1, 1]} : vector<16x64xf32> to vector<15x64xf32>
    %34 = tpu.concatenate %33, %32 in 0 : vector<15x64xf32>, vector<1x64xf32> -> vector<16x64xf32>
    %35 = tpu.concatenate %31, %28, %34 in 1 : vector<16x64xf32>, vector<16x64xf32>, vector<16x64xf32> -> vector<16x192xf32>
    %36 = arith.truncf %35 : vector<16x192xf32> to vector<16x192xbf16>
    %c0_20 = arith.constant 0 : index
    %c0_21 = arith.constant 0 : index
    %37 = vector.load %arg8[%c0_20, %c0_21] : memref<192x64xbf16, #tpu.memory_space<vmem>>, vector<192x64xbf16>
    %cst_22 = arith.constant dense<0.000000e+00> : vector<16x64xf32>
    %38 = tpu.matmul %36, %37, %cst_22 {dimension_numbers = #tpu.dot_dimension_numbers<[1], [0], [0], [1], [0, 0, 1, 1], [], []>} : vector<16x192xbf16>, vector<192x64xbf16>, vector<16x64xf32> -> vector<16x64xf32>
    %c0_23 = arith.constant 0 : index
    %c0_24 = arith.constant 0 : index
    %39 = vector.load %arg9[%c0_23, %c0_24] : memref<1x64xf32, #tpu.memory_space<vmem>>, vector<1x64xf32>
    %40 = vector.broadcast %39 : vector<1x64xf32> to vector<16x64xf32>
    %41 = arith.addf %38, %40 : vector<16x64xf32>
    %cst_25 = arith.constant 0.000000e+00 : f32
    %42 = vector.broadcast %cst_25 : f32 to vector<2x64xf32>
    %43 = vector.extract_strided_slice %41 {offsets = [0, 0], sizes = [14, 64], strides = [1, 1]} : vector<16x64xf32> to vector<14x64xf32>
    %44 = tpu.concatenate %42, %43 in 0 : vector<2x64xf32>, vector<14x64xf32> -> vector<16x64xf32>
    %cst_26 = arith.constant 0.000000e+00 : f32
    %45 = vector.broadcast %cst_26 : f32 to vector<2x64xf32>
    %46 = vector.extract_strided_slice %41 {offsets = [2, 0], sizes = [14, 64], strides = [1, 1]} : vector<16x64xf32> to vector<14x64xf32>
    %47 = tpu.concatenate %46, %45 in 0 : vector<14x64xf32>, vector<2x64xf32> -> vector<16x64xf32>
    %48 = tpu.concatenate %44, %41, %47 in 1 : vector<16x64xf32>, vector<16x64xf32>, vector<16x64xf32> -> vector<16x192xf32>
    %49 = arith.truncf %48 : vector<16x192xf32> to vector<16x192xbf16>
    %c0_27 = arith.constant 0 : index
    %c0_28 = arith.constant 0 : index
    %50 = vector.load %arg10[%c0_27, %c0_28] : memref<192x64xbf16, #tpu.memory_space<vmem>>, vector<192x64xbf16>
    %cst_29 = arith.constant dense<0.000000e+00> : vector<16x64xf32>
    %51 = tpu.matmul %49, %50, %cst_29 {dimension_numbers = #tpu.dot_dimension_numbers<[1], [0], [0], [1], [0, 0, 1, 1], [], []>} : vector<16x192xbf16>, vector<192x64xbf16>, vector<16x64xf32> -> vector<16x64xf32>
    %c0_30 = arith.constant 0 : index
    %c0_31 = arith.constant 0 : index
    %52 = vector.load %arg11[%c0_30, %c0_31] : memref<1x64xf32, #tpu.memory_space<vmem>>, vector<1x64xf32>
    %53 = vector.broadcast %52 : vector<1x64xf32> to vector<16x64xf32>
    %54 = arith.addf %51, %53 : vector<16x64xf32>
    %cst_32 = arith.constant 0.000000e+00 : f32
    %55 = vector.broadcast %cst_32 : f32 to vector<4x64xf32>
    %56 = vector.extract_strided_slice %54 {offsets = [0, 0], sizes = [12, 64], strides = [1, 1]} : vector<16x64xf32> to vector<12x64xf32>
    %57 = tpu.concatenate %55, %56 in 0 : vector<4x64xf32>, vector<12x64xf32> -> vector<16x64xf32>
    %cst_33 = arith.constant 0.000000e+00 : f32
    %58 = vector.broadcast %cst_33 : f32 to vector<4x64xf32>
    %59 = vector.extract_strided_slice %54 {offsets = [4, 0], sizes = [12, 64], strides = [1, 1]} : vector<16x64xf32> to vector<12x64xf32>
    %60 = tpu.concatenate %59, %58 in 0 : vector<12x64xf32>, vector<4x64xf32> -> vector<16x64xf32>
    %61 = tpu.concatenate %57, %54, %60 in 1 : vector<16x64xf32>, vector<16x64xf32>, vector<16x64xf32> -> vector<16x192xf32>
    %62 = arith.truncf %61 : vector<16x192xf32> to vector<16x192xbf16>
    %c0_34 = arith.constant 0 : index
    %c0_35 = arith.constant 0 : index
    %63 = vector.load %arg12[%c0_34, %c0_35] : memref<192x64xbf16, #tpu.memory_space<vmem>>, vector<192x64xbf16>
    %cst_36 = arith.constant dense<0.000000e+00> : vector<16x64xf32>
    %64 = tpu.matmul %62, %63, %cst_36 {dimension_numbers = #tpu.dot_dimension_numbers<[1], [0], [0], [1], [0, 0, 1, 1], [], []>} : vector<16x192xbf16>, vector<192x64xbf16>, vector<16x64xf32> -> vector<16x64xf32>
    %c0_37 = arith.constant 0 : index
    %c0_38 = arith.constant 0 : index
    %65 = vector.load %arg13[%c0_37, %c0_38] : memref<1x64xf32, #tpu.memory_space<vmem>>, vector<1x64xf32>
    %66 = vector.broadcast %65 : vector<1x64xf32> to vector<16x64xf32>
    %67 = arith.addf %64, %66 : vector<16x64xf32>
    %cst_39 = arith.constant 0.000000e+00 : f32
    %68 = vector.broadcast %cst_39 : f32 to vector<8x64xf32>
    %69 = vector.extract_strided_slice %67 {offsets = [0, 0], sizes = [8, 64], strides = [1, 1]} : vector<16x64xf32> to vector<8x64xf32>
    %70 = tpu.concatenate %68, %69 in 0 : vector<8x64xf32>, vector<8x64xf32> -> vector<16x64xf32>
    %cst_40 = arith.constant 0.000000e+00 : f32
    %71 = vector.broadcast %cst_40 : f32 to vector<8x64xf32>
    %72 = vector.extract_strided_slice %67 {offsets = [8, 0], sizes = [8, 64], strides = [1, 1]} : vector<16x64xf32> to vector<8x64xf32>
    %73 = tpu.concatenate %72, %71 in 0 : vector<8x64xf32>, vector<8x64xf32> -> vector<16x64xf32>
    %74 = tpu.concatenate %70, %67, %73 in 1 : vector<16x64xf32>, vector<16x64xf32>, vector<16x64xf32> -> vector<16x192xf32>
    %75 = arith.truncf %74 : vector<16x192xf32> to vector<16x192xbf16>
    %c0_41 = arith.constant 0 : index
    %c0_42 = arith.constant 0 : index
    %76 = vector.load %arg14[%c0_41, %c0_42] : memref<192x64xbf16, #tpu.memory_space<vmem>>, vector<192x64xbf16>
    %cst_43 = arith.constant dense<0.000000e+00> : vector<16x64xf32>
    %77 = tpu.matmul %75, %76, %cst_43 {dimension_numbers = #tpu.dot_dimension_numbers<[1], [0], [0], [1], [0, 0, 1, 1], [], []>} : vector<16x192xbf16>, vector<192x64xbf16>, vector<16x64xf32> -> vector<16x64xf32>
    %c0_44 = arith.constant 0 : index
    %c0_45 = arith.constant 0 : index
    %78 = vector.load %arg15[%c0_44, %c0_45] : memref<1x64xf32, #tpu.memory_space<vmem>>, vector<1x64xf32>
    %79 = vector.broadcast %78 : vector<1x64xf32> to vector<16x64xf32>
    %80 = arith.addf %77, %79 : vector<16x64xf32>
    %81 = arith.truncf %80 : vector<16x64xf32> to vector<16x64xbf16>
    %c0_46 = arith.constant 0 : index
    %c0_47 = arith.constant 0 : index
    %82 = vector.load %arg16[%c0_46, %c0_47] : memref<64x32xbf16, #tpu.memory_space<vmem>>, vector<64x32xbf16>
    %cst_48 = arith.constant dense<0.000000e+00> : vector<16x32xf32>
    %83 = tpu.matmul %81, %82, %cst_48 {dimension_numbers = #tpu.dot_dimension_numbers<[1], [0], [0], [1], [0, 0, 1, 1], [], []>} : vector<16x64xbf16>, vector<64x32xbf16>, vector<16x32xf32> -> vector<16x32xf32>
    %c0_49 = arith.constant 0 : index
    %c0_50 = arith.constant 0 : index
    %84 = vector.load %arg17[%c0_49, %c0_50] : memref<1x32xf32, #tpu.memory_space<vmem>>, vector<1x32xf32>
    %85 = vector.broadcast %84 : vector<1x32xf32> to vector<16x32xf32>
    %86 = arith.addf %83, %85 : vector<16x32xf32>
    %cst_51 = arith.constant 0.000000e+00 : f32
    %87 = vector.broadcast %cst_51 : f32 to vector<16x32xf32>
    %88 = arith.maximumf %86, %87 : vector<16x32xf32>
    %89 = math.absf %18 : vector<1x32xf32>
    %cst_52 = arith.constant 1.000000e+00 : f32
    %90 = vector.broadcast %cst_52 : f32 to vector<1x32xf32>
    %91 = arith.addf %90, %89 : vector<1x32xf32>
    %92 = arith.divf %18, %91 : vector<1x32xf32>
    %93 = vector.broadcast %92 : vector<1x32xf32> to vector<16x32xf32>
    %94 = arith.addf %88, %93 : vector<16x32xf32>
    %c0_53 = arith.constant 0 : index
    %c0_54 = arith.constant 0 : index
    %c0_55 = arith.constant 0 : index
    %95 = vector.load %arg18[%c0_53, %c0_54, %c0_55] : memref<1x16x32xf32, #tpu.memory_space<vmem>>, vector<1x16x32xf32>
    %96 = vector.shape_cast %95 : vector<1x16x32xf32> to vector<16x32xf32>
    %97 = vector.shape_cast %94 : vector<16x32xf32> to vector<1x16x32xf32>
    tpu.vector_store %arg18[%c0_53, %c0_54, %c0_55], %97 {strides = array<i32>} : memref<1x16x32xf32, #tpu.memory_space<vmem>>, vector<1x16x32xf32>,
    %98 = arith.addf %94, %20 : vector<16x32xf32>
    %cst_56 = arith.constant 0.707106769 : f32
    %99 = vector.broadcast %cst_56 : f32 to vector<16x32xf32>
    %100 = arith.mulf %98, %99 : vector<16x32xf32>
    %c0_57 = arith.constant 0 : index
    %c0_58 = arith.constant 0 : index
    %c0_59 = arith.constant 0 : index
    %101 = vector.load %arg19[%c0_57, %c0_58, %c0_59] : memref<1x16x32xf32, #tpu.memory_space<vmem>>, vector<1x16x32xf32>
    %102 = vector.shape_cast %101 : vector<1x16x32xf32> to vector<16x32xf32>
    %103 = vector.shape_cast %100 : vector<16x32xf32> to vector<1x16x32xf32>
    tpu.vector_store %arg19[%c0_57, %c0_58, %c0_59], %103 {strides = array<i32>} : memref<1x16x32xf32, #tpu.memory_space<vmem>>, vector<1x16x32xf32>,
    return
  }
  func.func @transform_0(%arg0: i32) -> (i32, i32) {
    %c0_i32 = arith.constant 0 : i32
    %c0_i32_0 = arith.constant 0 : i32
    return %arg0, %c0_i32 : i32, i32
  }
  func.func @transform_1(%arg0: i32) -> (i32, i32) {
    %c0_i32 = arith.constant 0 : i32
    %c0_i32_0 = arith.constant 0 : i32
    %c0_i32_1 = arith.constant 0 : i32
    return %c0_i32, %c0_i32_0 : i32, i32
  }
  func.func @transform_2(%arg0: i32) -> (i32, i32, i32) {
    %c0_i32 = arith.constant 0 : i32
    %c0_i32_0 = arith.constant 0 : i32
    %c0_i32_1 = arith.constant 0 : i32
    return %arg0, %c0_i32, %c0_i32_0 : i32, i32, i32
  }
  func.func @transform_3(%arg0: i32) -> (i32, i32) {
    %c0_i32 = arith.constant 0 : i32
    %c0_i32_0 = arith.constant 0 : i32
    %c0_i32_1 = arith.constant 0 : i32
    return %c0_i32, %c0_i32_0 : i32, i32
  }
  func.func @transform_4(%arg0: i32) -> (i32, i32) {
    %c0_i32 = arith.constant 0 : i32
    %c0_i32_0 = arith.constant 0 : i32
    %c0_i32_1 = arith.constant 0 : i32
    return %c0_i32, %c0_i32_0 : i32, i32
  }
  func.func @transform_5(%arg0: i32) -> (i32, i32) {
    %c0_i32 = arith.constant 0 : i32
    %c0_i32_0 = arith.constant 0 : i32
    %c0_i32_1 = arith.constant 0 : i32
    return %c0_i32, %c0_i32_0 : i32, i32
  }
  func.func @transform_6(%arg0: i32) -> (i32, i32) {
    %c0_i32 = arith.constant 0 : i32
    %c0_i32_0 = arith.constant 0 : i32
    %c0_i32_1 = arith.constant 0 : i32
    return %c0_i32, %c0_i32_0 : i32, i32
  }
  func.func @transform_7(%arg0: i32) -> (i32, i32) {
    %c0_i32 = arith.constant 0 : i32
    %c0_i32_0 = arith.constant 0 : i32
    %c0_i32_1 = arith.constant 0 : i32
    return %c0_i32, %c0_i32_0 : i32, i32
  }
  func.func @transform_8(%arg0: i32) -> (i32, i32) {
    %c0_i32 = arith.constant 0 : i32
    %c0_i32_0 = arith.constant 0 : i32
    %c0_i32_1 = arith.constant 0 : i32
    return %c0_i32, %c0_i32_0 : i32, i32
  }
  func.func @transform_9(%arg0: i32) -> (i32, i32) {
    %c0_i32 = arith.constant 0 : i32
    %c0_i32_0 = arith.constant 0 : i32
    %c0_i32_1 = arith.constant 0 : i32
    return %c0_i32, %c0_i32_0 : i32, i32
  }
  func.func @transform_10(%arg0: i32) -> (i32, i32) {
    %c0_i32 = arith.constant 0 : i32
    %c0_i32_0 = arith.constant 0 : i32
    %c0_i32_1 = arith.constant 0 : i32
    return %c0_i32, %c0_i32_0 : i32, i32
  }
  func.func @transform_11(%arg0: i32) -> (i32, i32) {
    %c0_i32 = arith.constant 0 : i32
    %c0_i32_0 = arith.constant 0 : i32
    %c0_i32_1 = arith.constant 0 : i32
    return %c0_i32, %c0_i32_0 : i32, i32
  }
  func.func @transform_12(%arg0: i32) -> (i32, i32) {
    %c0_i32 = arith.constant 0 : i32
    %c0_i32_0 = arith.constant 0 : i32
    %c0_i32_1 = arith.constant 0 : i32
    return %c0_i32, %c0_i32_0 : i32, i32
  }
  func.func @transform_13(%arg0: i32) -> (i32, i32) {
    %c0_i32 = arith.constant 0 : i32
    %c0_i32_0 = arith.constant 0 : i32
    %c0_i32_1 = arith.constant 0 : i32
    return %c0_i32, %c0_i32_0 : i32, i32
  }
  func.func @transform_14(%arg0: i32) -> (i32, i32) {
    %c0_i32 = arith.constant 0 : i32
    %c0_i32_0 = arith.constant 0 : i32
    %c0_i32_1 = arith.constant 0 : i32
    return %c0_i32, %c0_i32_0 : i32, i32
  }
  func.func @transform_15(%arg0: i32) -> (i32, i32) {
    %c0_i32 = arith.constant 0 : i32
    %c0_i32_0 = arith.constant 0 : i32
    %c0_i32_1 = arith.constant 0 : i32
    return %c0_i32, %c0_i32_0 : i32, i32
  }
  func.func @transform_16(%arg0: i32) -> (i32, i32) {
    %c0_i32 = arith.constant 0 : i32
    %c0_i32_0 = arith.constant 0 : i32
    %c0_i32_1 = arith.constant 0 : i32
    return %c0_i32, %c0_i32_0 : i32, i32
  }
  func.func @transform_17(%arg0: i32) -> (i32, i32, i32) {
    %c0_i32 = arith.constant 0 : i32
    %c0_i32_0 = arith.constant 0 : i32
    %c0_i32_1 = arith.constant 0 : i32
    return %arg0, %c0_i32, %c0_i32_0 : i32, i32, i32
  }
  func.func @transform_18(%arg0: i32) -> (i32, i32, i32) {
    %c0_i32 = arith.constant 0 : i32
    %c0_i32_0 = arith.constant 0 : i32
    %c0_i32_1 = arith.constant 0 : i32
    return %arg0, %c0_i32, %c0_i32_0 : i32, i32, i32
  }
}

</mosaic_0001>

<llo_original>
// kernel: encoder_forward.1
$region0: #{encoder_forward.1}
  #allocation0 [shape = 'u32[]', space=smem, size = 0x4, offset = 0x4, fixed_abs, tag = 'smem constant byte address 0x4 - core index']
  #allocation1 [shape = 'u32[144,128]{1,0:T(1,128)}', space=vmem, size = 0x12000, scoped, tag = 'internal scratch']
  %s0 = inlined_call_operand.vmem [shape: s32[32,1], index: 0, kind: input, shape index: {}]
  %s1 = inlined_call_operand.vmem [shape: f32[32,32], index: 1, kind: input, shape index: {}]
  %s2 = inlined_call_operand.vmem [shape: f32[2,1,16], index: 2, kind: input, shape index: {}]
  %s3 = inlined_call_operand.vmem [shape: bf16[16,32], index: 3, kind: input, shape index: {}]
  %s4 = inlined_call_operand.vmem [shape: f32[1,32], index: 4, kind: input, shape index: {}]
  %s5 = inlined_call_operand.vmem [shape: bf16[32,64], index: 5, kind: input, shape index: {}]
  %s6 = inlined_call_operand.vmem [shape: f32[1,64], index: 6, kind: input, shape index: {}]
  %s7 = inlined_call_operand.vmem [shape: bf16[192,64], index: 7, kind: input, shape index: {}]
  %s8 = inlined_call_operand.vmem [shape: f32[1,64], index: 8, kind: input, shape index: {}]
  %s9 = inlined_call_operand.vmem [shape: bf16[192,64], index: 9, kind: input, shape index: {}]
  %s10 = inlined_call_operand.vmem [shape: f32[1,64], index: 10, kind: input, shape index: {}]
  %s11 = inlined_call_operand.vmem [shape: bf16[192,64], index: 11, kind: input, shape index: {}]
  %s12 = inlined_call_operand.vmem [shape: f32[1,64], index: 12, kind: input, shape index: {}]
  %s13 = inlined_call_operand.vmem [shape: bf16[192,64], index: 13, kind: input, shape index: {}]
  %s14 = inlined_call_operand.vmem [shape: f32[1,64], index: 14, kind: input, shape index: {}]
  %s15 = inlined_call_operand.vmem [shape: bf16[64,32], index: 15, kind: input, shape index: {}]
  %s16 = inlined_call_operand.vmem [shape: f32[1,32], index: 16, kind: input, shape index: {}]
  %s17 = inlined_call_operand.hbm [shape: f32[2,16,32], index: 17, kind: output, shape index: {0}]
  %s18 = inlined_call_operand.hbm [shape: f32[2,16,32], index: 18, kind: output, shape index: {1}]
  %19 = xla_tuple %s17, %s18
  %s20 = sld [smem:[#allocation0]]
  $region109: #{encoder_forward.1} parent=0
    _
  %s22 = ssub.s32 1, %s20
  %s23 = scalar_select 0, %s22, %s20
  $region1: #{encoder_forward.1} parent=0
    #allocation2 [shape = 'u8[16384]{0}', space=vmem, size = 0x4000, scoped, tag = 'output window, operand 0']
    #allocation3 [shape = 's32[2]{0}', space=sflag, size = 0x8, scoped, tag = 'scoped memory for encoder_forward.1']
    #allocation4 [shape = 'u8[16384]{0}', space=vmem, size = 0x4000, scoped, tag = 'output window, operand 1']
    #allocation5 [shape = 's32[2]{0}', space=sflag, size = 0x8, scoped, tag = 'scoped memory for encoder_forward.1']
    %24 = vsyncpa [#allocation3], 0
    %s25 = scalar_lea.sflag [#allocation3], 1
    %26 = vsyncpa %s25, 0
    %27 = vsyncpa [#allocation5], 0
    %s28 = scalar_lea.sflag [#allocation5], 1
    %29 = vsyncpa %s28, 0
    loop: start=0, step=1, limit=4
    $region2: #{encoder_forward.1} parent=1 // loop_pre_header
      _
    $region3: #{encoder_forward.1} parent=1 // loop_header
      %s31 = sphi 0, %s35
      %p32 = scmp.ge.s32.totalorder %s31, 4
      %s41 = sphi 0, %s43
      %s44 = sphi 0, %s41
      %s45 = sphi 0, %s44
      %s61 = sphi 0, %s45
      %s65 = sphi 0, %s65
      %s67 = sphi 0, %s65
      %s68 = sphi 0, %s67
      %s82 = sphi 0, %s68
      %s88 = sphi 0, %s90
      %s91 = sphi 0, %s88
      %s92 = sphi 0, %s91
      %s108 = sphi 0, %s92
      %s112 = sphi 0, %s112
      %s114 = sphi 0, %s112
      %s115 = sphi 0, %s114
      %s129 = sphi 0, %s115
      %s133 = sphi 0, %s133
      %s135 = sphi 0, %s133
      %s136 = sphi 0, %s135
      %s150 = sphi 0, %s136
      %s154 = sphi 0, %s154
      %s156 = sphi 0, %s154
      %s157 = sphi 0, %s156
      %s171 = sphi 0, %s157
      %s175 = sphi 0, %s175
      %s177 = sphi 0, %s175
      %s178 = sphi 0, %s177
      %s192 = sphi 0, %s178
      %s196 = sphi 0, %s196
      %s198 = sphi 0, %s196
      %s199 = sphi 0, %s198
      %s213 = sphi 0, %s199
      %s217 = sphi 0, %s217
      %s219 = sphi 0, %s217
      %s220 = sphi 0, %s219
      %s234 = sphi 0, %s220
      %s238 = sphi 0, %s238
      %s240 = sphi 0, %s238
      %s241 = sphi 0, %s240
      %s255 = sphi 0, %s241
      %s259 = sphi 0, %s259
      %s261 = sphi 0, %s259
      %s262 = sphi 0, %s261
      %s276 = sphi 0, %s262
      %s280 = sphi 0, %s280
      %s282 = sphi 0, %s280
      %s283 = sphi 0, %s282
      %s297 = sphi 0, %s283
      %s301 = sphi 0, %s301
      %s303 = sphi 0, %s301
      %s304 = sphi 0, %s303
      %s318 = sphi 0, %s304
      %s322 = sphi 0, %s322
      %s324 = sphi 0, %s322
      %s325 = sphi 0, %s324
      %s339 = sphi 0, %s325
      %s343 = sphi 0, %s343
      %s345 = sphi 0, %s343
      %s346 = sphi 0, %s345
      %s360 = sphi 0, %s346
      %s364 = sphi 0, %s364
      %s366 = sphi 0, %s364
      %s367 = sphi 0, %s366
      %s381 = sphi 0, %s367
      %s385 = sphi 0, %s385
      %s387 = sphi 0, %s385
      %s388 = sphi 0, %s387
      %s402 = sphi 0, %s388
      %s408 = sphi 0, %s410
      %s411 = sphi 0, %s408
      %s412 = sphi 0, %s411
      %s428 = sphi 0, %s412
      %s434 = sphi 0, %s436
      %s437 = sphi 0, %s434
      %s438 = sphi 0, %s437
      %s454 = sphi 0, %s438
    $region4: #{encoder_forward.1} parent=1 // loop_header_branch
      %34 = sbr.rel (%p32) target = $region8
    $region5: #{encoder_forward.1} parent=1 // loop_body
      %s36 = ssub.s32 %s31, 1
      %s37 = ssub.s32 %s31, 2
      %s38 = sadd.s32 %s31, 1
      %s39 = ssub.s32 %s31, %s38
      %p40 = scmp.eq.s32.totalorder %s39, 0
      %s42 = sadd.s32 %s41, 1
      %s43 = scalar_select %p40, %s41, %s42
      %p46 = pneg %p40
      %p47 = scmp.eq.s32.totalorder %s31, 1
      %p48 = por %p46, %p47
      %p49 = scmp.ne.s32.totalorder %s41, %s44
      %p50 = scmp.eq.s32.totalorder %s31, 0
      %p51 = por %p49, %p50
      %p52 = scmp.ne.s32.totalorder %s41, %s44
      %p53 = scmp.eq.s32.totalorder %s36, 1
      %p54 = por %p52, %p53
      %p55 = scmp.ne.s32.totalorder %s44, %s45
      %p56 = scmp.eq.s32.totalorder %s36, 0
      %p57 = por %p55, %p56
      %p58 = scmp.ne.s32.totalorder %s44, %s45
      %p59 = scmp.eq.s32.totalorder %s37, 1
      %p60 = por %p58, %p59
      %p62 = scmp.ne.s32.totalorder %s45, %s61
      %p63 = scmp.eq.s32.totalorder %s37, 0
      %p64 = por %p62, %p63
      %s66 = sadd.s32 %s65, 1
      %p69 = scmp.eq.s32.totalorder %s31, 1
      %p70 = scmp.ne.s32.totalorder %s65, %s67
      %p71 = scmp.eq.s32.totalorder %s31, 0
      %p72 = por %p70, %p71
      %p73 = scmp.ne.s32.totalorder %s65, %s67
      %p74 = scmp.eq.s32.totalorder %s36, 1
      %p75 = por %p73, %p74
      %p76 = scmp.ne.s32.totalorder %s67, %s68
      %p77 = scmp.eq.s32.totalorder %s36, 0
      %p78 = por %p76, %p77
      %p79 = scmp.ne.s32.totalorder %s67, %s68
      %p80 = scmp.eq.s32.totalorder %s37, 1
      %p81 = por %p79, %p80
      %p83 = scmp.ne.s32.totalorder %s68, %s82
      %p84 = scmp.eq.s32.totalorder %s37, 0
      %p85 = por %p83, %p84
      %s86 = ssub.s32 %s31, %s38
      %p87 = scmp.eq.s32.totalorder %s86, 0
      %s89 = sadd.s32 %s88, 1
      %s90 = scalar_select %p87, %s88, %s89
      %p93 = pneg %p87
      %p94 = scmp.eq.s32.totalorder %s31, 1
      %p95 = por %p93, %p94
      %p96 = scmp.ne.s32.totalorder %s88, %s91
      %p97 = scmp.eq.s32.totalorder %s31, 0
      %p98 = por %p96, %p97
      %p99 = scmp.ne.s32.totalorder %s88, %s91
      %p100 = scmp.eq.s32.totalorder %s36, 1
      %p101 = por %p99, %p100
      %p102 = scmp.ne.s32.totalorder %s91, %s92
      %p103 = scmp.eq.s32.totalorder %s36, 0
      %p104 = por %p102, %p103
      %p105 = scmp.ne.s32.totalorder %s91, %s92
      %p106 = scmp.eq.s32.totalorder %s37, 1
      %p107 = por %p105, %p106
      %p109 = scmp.ne.s32.totalorder %s92, %s108
      %p110 = scmp.eq.s32.totalorder %s37, 0
      %p111 = por %p109, %p110
      %s113 = sadd.s32 %s112, 1
      %p116 = scmp.eq.s32.totalorder %s31, 1
      %p117 = scmp.ne.s32.totalorder %s112, %s114
      %p118 = scmp.eq.s32.totalorder %s31, 0
      %p119 = por %p117, %p118
      %p120 = scmp.ne.s32.totalorder %s112, %s114
      %p121 = scmp.eq.s32.totalorder %s36, 1
      %p122 = por %p120, %p121
      %p123 = scmp.ne.s32.totalorder %s114, %s115
      %p124 = scmp.eq.s32.totalorder %s36, 0
      %p125 = por %p123, %p124
      %p126 = scmp.ne.s32.totalorder %s114, %s115
      %p127 = scmp.eq.s32.totalorder %s37, 1
      %p128 = por %p126, %p127
      %p130 = scmp.ne.s32.totalorder %s115, %s129
      %p131 = scmp.eq.s32.totalorder %s37, 0
      %p132 = por %p130, %p131
      %s134 = sadd.s32 %s133, 1
      %p137 = scmp.eq.s32.totalorder %s31, 1
      %p138 = scmp.ne.s32.totalorder %s133, %s135
      %p139 = scmp.eq.s32.totalorder %s31, 0
      %p140 = por %p138, %p139
      %p141 = scmp.ne.s32.totalorder %s133, %s135
      %p142 = scmp.eq.s32.totalorder %s36, 1
      %p143 = por %p141, %p142
      %p144 = scmp.ne.s32.totalorder %s135, %s136
      %p145 = scmp.eq.s32.totalorder %s36, 0
      %p146 = por %p144, %p145
      %p147 = scmp.ne.s32.totalorder %s135, %s136
      %p148 = scmp.eq.s32.totalorder %s37, 1
      %p149 = por %p147, %p148
      %p151 = scmp.ne.s32.totalorder %s136, %s150
      %p152 = scmp.eq.s32.totalorder %s37, 0
      %p153 = por %p151, %p152
      %s155 = sadd.s32 %s154, 1
      %p158 = scmp.eq.s32.totalorder %s31, 1
      %p159 = scmp.ne.s32.totalorder %s154, %s156
      %p160 = scmp.eq.s32.totalorder %s31, 0
      %p161 = por %p159, %p160
      %p162 = scmp.ne.s32.totalorder %s154, %s156
      %p163 = scmp.eq.s32.totalorder %s36, 1
      %p164 = por %p162, %p163
      %p165 = scmp.ne.s32.totalorder %s156, %s157
      %p166 = scmp.eq.s32.totalorder %s36, 0
      %p167 = por %p165, %p166
      %p168 = scmp.ne.s32.totalorder %s156, %s157
      %p169 = scmp.eq.s32.totalorder %s37, 1
      %p170 = por %p168, %p169
      %p172 = scmp.ne.s32.totalorder %s157, %s171
      %p173 = scmp.eq.s32.totalorder %s37, 0
      %p174 = por %p172, %p173
      %s176 = sadd.s32 %s175, 1
      %p179 = scmp.eq.s32.totalorder %s31, 1
      %p180 = scmp.ne.s32.totalorder %s175, %s177
      %p181 = scmp.eq.s32.totalorder %s31, 0
      %p182 = por %p180, %p181
      %p183 = scmp.ne.s32.totalorder %s175, %s177
      %p184 = scmp.eq.s32.totalorder %s36, 1
      %p185 = por %p183, %p184
      %p186 = scmp.ne.s32.totalorder %s177, %s178
      %p187 = scmp.eq.s32.totalorder %s36, 0
      %p188 = por %p186, %p187
      %p189 = scmp.ne.s32.totalorder %s177, %s178
      %p190 = scmp.eq.s32.totalorder %s37, 1
      %p191 = por %p189, %p190
      %p193 = scmp.ne.s32.totalorder %s178, %s192
      %p194 = scmp.eq.s32.totalorder %s37, 0
      %p195 = por %p193, %p194
      %s197 = sadd.s32 %s196, 1
      %p200 = scmp.eq.s32.totalorder %s31, 1
      %p201 = scmp.ne.s32.totalorder %s196, %s198
      %p202 = scmp.eq.s32.totalorder %s31, 0
      %p203 = por %p201, %p202
      %p204 = scmp.ne.s32.totalorder %s196, %s198
      %p205 = scmp.eq.s32.totalorder %s36, 1
      %p206 = por %p204, %p205
      %p207 = scmp.ne.s32.totalorder %s198, %s199
      %p208 = scmp.eq.s32.totalorder %s36, 0
      %p209 = por %p207, %p208
      %p210 = scmp.ne.s32.totalorder %s198, %s199
      %p211 = scmp.eq.s32.totalorder %s37, 1
      %p212 = por %p210, %p211
      %p214 = scmp.ne.s32.totalorder %s199, %s213
      %p215 = scmp.eq.s32.totalorder %s37, 0
      %p216 = por %p214, %p215
      %s218 = sadd.s32 %s217, 1
      %p221 = scmp.eq.s32.totalorder %s31, 1
      %p222 = scmp.ne.s32.totalorder %s217, %s219
      %p223 = scmp.eq.s32.totalorder %s31, 0
      %p224 = por %p222, %p223
      %p225 = scmp.ne.s32.totalorder %s217, %s219
      %p226 = scmp.eq.s32.totalorder %s36, 1
      %p227 = por %p225, %p226
      %p228 = scmp.ne.s32.totalorder %s219, %s220
      %p229 = scmp.eq.s32.totalorder %s36, 0
      %p230 = por %p228, %p229
      %p231 = scmp.ne.s32.totalorder %s219, %s220
      %p232 = scmp.eq.s32.totalorder %s37, 1
      %p233 = por %p231, %p232
      %p235 = scmp.ne.s32.totalorder %s220, %s234
      %p236 = scmp.eq.s32.totalorder %s37, 0
      %p237 = por %p235, %p236
      %s239 = sadd.s32 %s238, 1
      %p242 = scmp.eq.s32.totalorder %s31, 1
      %p243 = scmp.ne.s32.totalorder %s238, %s240
      %p244 = scmp.eq.s32.totalorder %s31, 0
      %p245 = por %p243, %p244
      %p246 = scmp.ne.s32.totalorder %s238, %s240
      %p247 = scmp.eq.s32.totalorder %s36, 1
      %p248 = por %p246, %p247
      %p249 = scmp.ne.s32.totalorder %s240, %s241
      %p250 = scmp.eq.s32.totalorder %s36, 0
      %p251 = por %p249, %p250
      %p252 = scmp.ne.s32.totalorder %s240, %s241
      %p253 = scmp.eq.s32.totalorder %s37, 1
      %p254 = por %p252, %p253
      %p256 = scmp.ne.s32.totalorder %s241, %s255
      %p257 = scmp.eq.s32.totalorder %s37, 0
      %p258 = por %p256, %p257
      %s260 = sadd.s32 %s259, 1
      %p263 = scmp.eq.s32.totalorder %s31, 1
      %p264 = scmp.ne.s32.totalorder %s259, %s261
      %p265 = scmp.eq.s32.totalorder %s31, 0
      %p266 = por %p264, %p265
      %p267 = scmp.ne.s32.totalorder %s259, %s261
      %p268 = scmp.eq.s32.totalorder %s36, 1
      %p269 = por %p267, %p268
      %p270 = scmp.ne.s32.totalorder %s261, %s262
      %p271 = scmp.eq.s32.totalorder %s36, 0
      %p272 = por %p270, %p271
      %p273 = scmp.ne.s32.totalorder %s261, %s262
      %p274 = scmp.eq.s32.totalorder %s37, 1
      %p275 = por %p273, %p274
      %p277 = scmp.ne.s32.totalorder %s262, %s276
      %p278 = scmp.eq.s32.totalorder %s37, 0
      %p279 = por %p277, %p278
      %s281 = sadd.s32 %s280, 1
      %p284 = scmp.eq.s32.totalorder %s31, 1
      %p285 = scmp.ne.s32.totalorder %s280, %s282
      %p286 = scmp.eq.s32.totalorder %s31, 0
      %p287 = por %p285, %p286
      %p288 = scmp.ne.s32.totalorder %s280, %s282
      %p289 = scmp.eq.s32.totalorder %s36, 1
      %p290 = por %p288, %p289
      %p291 = scmp.ne.s32.totalorder %s282, %s283
      %p292 = scmp.eq.s32.totalorder %s36, 0
      %p293 = por %p291, %p292
      %p294 = scmp.ne.s32.totalorder %s282, %s283
      %p295 = scmp.eq.s32.totalorder %s37, 1
      %p296 = por %p294, %p295
      %p298 = scmp.ne.s32.totalorder %s283, %s297
      %p299 = scmp.eq.s32.totalorder %s37, 0
      %p300 = por %p298, %p299
      %s302 = sadd.s32 %s301, 1
      %p305 = scmp.eq.s32.totalorder %s31, 1
      %p306 = scmp.ne.s32.totalorder %s301, %s303
      %p307 = scmp.eq.s32.totalorder %s31, 0
      %p308 = por %p306, %p307
      %p309 = scmp.ne.s32.totalorder %s301, %s303
      %p310 = scmp.eq.s32.totalorder %s36, 1
      %p311 = por %p309, %p310
      %p312 = scmp.ne.s32.totalorder %s303, %s304
      %p313 = scmp.eq.s32.totalorder %s36, 0
      %p314 = por %p312, %p313
      %p315 = scmp.ne.s32.totalorder %s303, %s304
      %p316 = scmp.eq.s32.totalorder %s37, 1
      %p317 = por %p315, %p316
      %p319 = scmp.ne.s32.totalorder %s304, %s318
      %p320 = scmp.eq.s32.totalorder %s37, 0
      %p321 = por %p319, %p320
      %s323 = sadd.s32 %s322, 1
      %p326 = scmp.eq.s32.totalorder %s31, 1
      %p327 = scmp.ne.s32.totalorder %s322, %s324
      %p328 = scmp.eq.s32.totalorder %s31, 0
      %p329 = por %p327, %p328
      %p330 = scmp.ne.s32.totalorder %s322, %s324
      %p331 = scmp.eq.s32.totalorder %s36, 1
      %p332 = por %p330, %p331
      %p333 = scmp.ne.s32.totalorder %s324, %s325
      %p334 = scmp.eq.s32.totalorder %s36, 0
      %p335 = por %p333, %p334
      %p336 = scmp.ne.s32.totalorder %s324, %s325
      %p337 = scmp.eq.s32.totalorder %s37, 1
      %p338 = por %p336, %p337
      %p340 = scmp.ne.s32.totalorder %s325, %s339
      %p341 = scmp.eq.s32.totalorder %s37, 0
      %p342 = por %p340, %p341
      %s344 = sadd.s32 %s343, 1
      %p347 = scmp.eq.s32.totalorder %s31, 1
      %p348 = scmp.ne.s32.totalorder %s343, %s345
      %p349 = scmp.eq.s32.totalorder %s31, 0
      %p350 = por %p348, %p349
      %p351 = scmp.ne.s32.totalorder %s343, %s345
      %p352 = scmp.eq.s32.totalorder %s36, 1
      %p353 = por %p351, %p352
      %p354 = scmp.ne.s32.totalorder %s345, %s346
      %p355 = scmp.eq.s32.totalorder %s36, 0
      %p356 = por %p354, %p355
      %p357 = scmp.ne.s32.totalorder %s345, %s346
      %p358 = scmp.eq.s32.totalorder %s37, 1
      %p359 = por %p357, %p358
      %p361 = scmp.ne.s32.totalorder %s346, %s360
      %p362 = scmp.eq.s32.totalorder %s37, 0
      %p363 = por %p361, %p362
      %s365 = sadd.s32 %s364, 1
      %p368 = scmp.eq.s32.totalorder %s31, 1
      %p369 = scmp.ne.s32.totalorder %s364, %s366
      %p370 = scmp.eq.s32.totalorder %s31, 0
      %p371 = por %p369, %p370
      %p372 = scmp.ne.s32.totalorder %s364, %s366
      %p373 = scmp.eq.s32.totalorder %s36, 1
      %p374 = por %p372, %p373
      %p375 = scmp.ne.s32.totalorder %s366, %s367
      %p376 = scmp.eq.s32.totalorder %s36, 0
      %p377 = por %p375, %p376
      %p378 = scmp.ne.s32.totalorder %s366, %s367
      %p379 = scmp.eq.s32.totalorder %s37, 1
      %p380 = por %p378, %p379
      %p382 = scmp.ne.s32.totalorder %s367, %s381
      %p383 = scmp.eq.s32.totalorder %s37, 0
      %p384 = por %p382, %p383
      %s386 = sadd.s32 %s385, 1
      %p389 = scmp.eq.s32.totalorder %s31, 1
      %p390 = scmp.ne.s32.totalorder %s385, %s387
      %p391 = scmp.eq.s32.totalorder %s31, 0
      %p392 = por %p390, %p391
      %p393 = scmp.ne.s32.totalorder %s385, %s387
      %p394 = scmp.eq.s32.totalorder %s36, 1
      %p395 = por %p393, %p394
      %p396 = scmp.ne.s32.totalorder %s387, %s388
      %p397 = scmp.eq.s32.totalorder %s36, 0
      %p398 = por %p396, %p397
      %p399 = scmp.ne.s32.totalorder %s387, %s388
      %p400 = scmp.eq.s32.totalorder %s37, 1
      %p401 = por %p399, %p400
      %p403 = scmp.ne.s32.totalorder %s388, %s402
      %p404 = scmp.eq.s32.totalorder %s37, 0
      %p405 = por %p403, %p404
      %s406 = ssub.s32 %s31, %s38
      %p407 = scmp.eq.s32.totalorder %s406, 0
      %s409 = sadd.s32 %s408, 1
      %s410 = scalar_select %p407, %s408, %s409
      %p413 = pneg %p407
      %p414 = scmp.eq.s32.totalorder %s31, 1
      %p415 = por %p413, %p414
      %p416 = scmp.ne.s32.totalorder %s408, %s411
      %p417 = scmp.eq.s32.totalorder %s31, 0
      %p418 = por %p416, %p417
      %p419 = scmp.ne.s32.totalorder %s408, %s411
      %p420 = scmp.eq.s32.totalorder %s36, 1
      %p421 = por %p419, %p420
      %p422 = scmp.ne.s32.totalorder %s411, %s412
      %p423 = scmp.eq.s32.totalorder %s36, 0
      %p424 = por %p422, %p423
      %p425 = scmp.ne.s32.totalorder %s411, %s412
      %p426 = scmp.eq.s32.totalorder %s37, 1
      %p427 = por %p425, %p426
      %p429 = scmp.ne.s32.totalorder %s412, %s428
      %p430 = scmp.eq.s32.totalorder %s37, 0
      %p431 = por %p429, %p430
      %s432 = ssub.s32 %s31, %s38
      %p433 = scmp.eq.s32.totalorder %s432, 0
      %s435 = sadd.s32 %s434, 1
      %s436 = scalar_select %p433, %s434, %s435
      %p439 = pneg %p433
      %p440 = scmp.eq.s32.totalorder %s31, 1
      %p441 = por %p439, %p440
      %p442 = scmp.ne.s32.totalorder %s434, %s437
      %p443 = scmp.eq.s32.totalorder %s31, 0
      %p444 = por %p442, %p443
      %p445 = scmp.ne.s32.totalorder %s434, %s437
      %p446 = scmp.eq.s32.totalorder %s36, 1
      %p447 = por %p445, %p446
      %p448 = scmp.ne.s32.totalorder %s437, %s438
      %p449 = scmp.eq.s32.totalorder %s36, 0
      %p450 = por %p448, %p449
      %p451 = scmp.ne.s32.totalorder %s437, %s438
      %p452 = scmp.eq.s32.totalorder %s37, 1
      %p453 = por %p451, %p452
      %p455 = scmp.ne.s32.totalorder %s438, %s454
      %p456 = scmp.eq.s32.totalorder %s37, 0
      %p457 = por %p455, %p456
      %p458 = scmp.le.s32.totalorder 1, %s31
      %p459 = scmp.lt.s32.totalorder %s31, 3
      %p460 = pnand %p458, %p459
      %p461 = pneg %p460
      // Predicated region
      $region9: #{encoder_forward.1} parent=5 // pred_check
        _
      $region10: #{encoder_forward.1} parent=5 // pred_check_branch
        %463 = sbr.rel (%p460) target = $region12
      $region11: #{encoder_forward.1} parent=5 // pred_region
        %s464 = ssub.s32 %s31, 1
        // Predicated region
        $region13: #{encoder_forward.1} parent=11 // pred_check
          %p465 = pneg %p78
        $region14: #{encoder_forward.1} parent=11 // pred_check_branch
          %467 = sbr.rel (%p465) target = $region16
        $region15: #{encoder_forward.1} parent=11 // pred_region
          _
        $region16: #{encoder_forward.1} parent=11 // pred_fallthru
          _
        // Predicated region
        $region17: #{encoder_forward.1} parent=11 // pred_check
          %p468 = pneg %p125
        $region18: #{encoder_forward.1} parent=11 // pred_check_branch
          %470 = sbr.rel (%p468) target = $region20
        $region19: #{encoder_forward.1} parent=11 // pred_region
          _
        $region20: #{encoder_forward.1} parent=11 // pred_fallthru
          _
        // Predicated region
        $region21: #{encoder_forward.1} parent=11 // pred_check
          %p471 = pneg %p146
        $region22: #{encoder_forward.1} parent=11 // pred_check_branch
          %473 = sbr.rel (%p471) target = $region24
        $region23: #{encoder_forward.1} parent=11 // pred_region
          _
        $region24: #{encoder_forward.1} parent=11 // pred_fallthru
          _
        // Predicated region
        $region25: #{encoder_forward.1} parent=11 // pred_check
          %p474 = pneg %p167
        $region26: #{encoder_forward.1} parent=11 // pred_check_branch
          %476 = sbr.rel (%p474) target = $region28
        $region27: #{encoder_forward.1} parent=11 // pred_region
          _
        $region28: #{encoder_forward.1} parent=11 // pred_fallthru
          _
        // Predicated region
        $region29: #{encoder_forward.1} parent=11 // pred_check
          %p477 = pneg %p188
        $region30: #{encoder_forward.1} parent=11 // pred_check_branch
          %479 = sbr.rel (%p477) target = $region32
        $region31: #{encoder_forward.1} parent=11 // pred_region
          _
        $region32: #{encoder_forward.1} parent=11 // pred_fallthru
          _
        // Predicated region
        $region33: #{encoder_forward.1} parent=11 // pred_check
          %p480 = pneg %p209
        $region34: #{encoder_forward.1} parent=11 // pred_check_branch
          %482 = sbr.rel (%p480) target = $region36
        $region35: #{encoder_forward.1} parent=11 // pred_region
          _
        $region36: #{encoder_forward.1} parent=11 // pred_fallthru
          _
        // Predicated region
        $region37: #{encoder_forward.1} parent=11 // pred_check
          %p483 = pneg %p230
        $region38: #{encoder_forward.1} parent=11 // pred_check_branch
          %485 = sbr.rel (%p483) target = $region40
        $region39: #{encoder_forward.1} parent=11 // pred_region
          _
        $region40: #{encoder_forward.1} parent=11 // pred_fallthru
          _
        // Predicated region
        $region41: #{encoder_forward.1} parent=11 // pred_check
          %p486 = pneg %p251
        $region42: #{encoder_forward.1} parent=11 // pred_check_branch
          %488 = sbr.rel (%p486) target = $region44
        $region43: #{encoder_forward.1} parent=11 // pred_region
          _
        $region44: #{encoder_forward.1} parent=11 // pred_fallthru
          _
        // Predicated region
        $region45: #{encoder_forward.1} parent=11 // pred_check
          %p489 = pneg %p272
        $region46: #{encoder_forward.1} parent=11 // pred_check_branch
          %491 = sbr.rel (%p489) target = $region48
        $region47: #{encoder_forward.1} parent=11 // pred_region
          _
        $region48: #{encoder_forward.1} parent=11 // pred_fallthru
          _
        // Predicated region
        $region49: #{encoder_forward.1} parent=11 // pred_check
          %p492 = pneg %p293
        $region50: #{encoder_forward.1} parent=11 // pred_check_branch
          %494 = sbr.rel (%p492) target = $region52
        $region51: #{encoder_forward.1} parent=11 // pred_region
          _
        $region52: #{encoder_forward.1} parent=11 // pred_fallthru
          _
        // Predicated region
        $region53: #{encoder_forward.1} parent=11 // pred_check
          %p495 = pneg %p314
        $region54: #{encoder_forward.1} parent=11 // pred_check_branch
          %497 = sbr.rel (%p495) target = $region56
        $region55: #{encoder_forward.1} parent=11 // pred_region
          _
        $region56: #{encoder_forward.1} parent=11 // pred_fallthru
          _
        // Predicated region
        $region57: #{encoder_forward.1} parent=11 // pred_check
          %p498 = pneg %p335
        $region58: #{encoder_forward.1} parent=11 // pred_check_branch
          %500 = sbr.rel (%p498) target = $region60
        $region59: #{encoder_forward.1} parent=11 // pred_region
          _
        $region60: #{encoder_forward.1} parent=11 // pred_fallthru
          _
        // Predicated region
        $region61: #{encoder_forward.1} parent=11 // pred_check
          %p501 = pneg %p356
        $region62: #{encoder_forward.1} parent=11 // pred_check_branch
          %503 = sbr.rel (%p501) target = $region64
        $region63: #{encoder_forward.1} parent=11 // pred_region
          _
        $region64: #{encoder_forward.1} parent=11 // pred_fallthru
          _
        // Predicated region
        $region65: #{encoder_forward.1} parent=11 // pred_check
          %p504 = pneg %p377
        $region66: #{encoder_forward.1} parent=11 // pred_check_branch
          %506 = sbr.rel (%p504) target = $region68
        $region67: #{encoder_forward.1} parent=11 // pred_region
          _
        $region68: #{encoder_forward.1} parent=11 // pred_fallthru
          _
        // Predicated region
        $region69: #{encoder_forward.1} parent=11 // pred_check
          %p507 = pneg %p398
        $region70: #{encoder_forward.1} parent=11 // pred_check_branch
          %509 = sbr.rel (%p507) target = $region72
        $region71: #{encoder_forward.1} parent=11 // pred_region
          _
        $region72: #{encoder_forward.1} parent=11 // pred_fallthru
          _
      $region12: #{encoder_forward.1} parent=5 // pred_fallthru
        _
      %p510 = scmp.lt.s32.totalorder %s31, 2
      // Predicated region
      $region73: #{encoder_forward.1} parent=5 // pred_check
        %p511 = pneg %p510
      $region74: #{encoder_forward.1} parent=5 // pred_check_branch
        %513 = sbr.rel (%p511) target = $region76
      $region75: #{encoder_forward.1} parent=5 // pred_region
        // Predicated region
        $region77: #{encoder_forward.1} parent=75 // pred_check
          %p514 = pneg %p51
        $region78: #{encoder_forward.1} parent=75 // pred_check_branch
          %516 = sbr.rel (%p514) target = $region80
        $region79: #{encoder_forward.1} parent=75 // pred_region
          %s517 = smul.u32 2, %s31
          %p518 = scmp.lt.s32.totalorder %s517, 3
          %s519 = scalar_select %p518, %s517, 3
          %s520 = smul.addr %s519, 8
          %s521 = scalar_lea.vmem %s0, %s520
          %s522 = smul.u32 2, %s31
        $region80: #{encoder_forward.1} parent=75 // pred_fallthru
          _
        // Predicated region
        $region81: #{encoder_forward.1} parent=75 // pred_check
          %p523 = pneg %p98
        $region82: #{encoder_forward.1} parent=75 // pred_check_branch
          %525 = sbr.rel (%p523) target = $region84
        $region83: #{encoder_forward.1} parent=75 // pred_region
          %p526 = scmp.lt.s32.totalorder %s31, 1
          %s527 = scalar_select %p526, %s31, 1
          %s528 = scalar_lea.vmem %s2, %s527
        $region84: #{encoder_forward.1} parent=75 // pred_fallthru
          _
      $region76: #{encoder_forward.1} parent=5 // pred_fallthru
        _
      %p529 = scmp.le.s32.totalorder 1, %s31
      %p530 = scmp.lt.s32.totalorder %s31, 3
      %p531 = pnand %p529, %p530
      %p532 = pneg %p531
      // Predicated region
      $region85: #{encoder_forward.1} parent=5 // pred_check
        _
      $region86: #{encoder_forward.1} parent=5 // pred_check_branch
        %534 = sbr.rel (%p531) target = $region88
      $region87: #{encoder_forward.1} parent=5 // pred_region
        %s535 = ssub.s32 %s31, 1
        %s536 = smul.u32 2, %s36
        %p537 = scmp.lt.s32.totalorder %s536, 3
        %s538 = scalar_select %p537, %s536, 3
        %s539 = smul.addr %s538, 8
        %s540 = scalar_lea.vmem %s0, %s539
        %p541 = pneg %p57
        %p542 = pneg %p54
        %p543 = pneg %p78
        %p544 = pneg %p75
        %p545 = scmp.lt.s32.totalorder %s36, 1
        %s546 = scalar_select %p545, %s36, 1
        %s547 = scalar_lea.vmem %s2, %s546
        %p548 = pneg %p104
        %p549 = pneg %p101
        %p550 = pneg %p125
        %p551 = pneg %p122
        %p552 = pneg %p146
        %p553 = pneg %p143
        %p554 = pneg %p167
        %p555 = pneg %p164
        %p556 = pneg %p188
        %p557 = pneg %p185
        %p558 = pneg %p209
        %p559 = pneg %p206
        %p560 = pneg %p230
        %p561 = pneg %p227
        %p562 = pneg %p251
        %p563 = pneg %p248
        %p564 = pneg %p272
        %p565 = pneg %p269
        %p566 = pneg %p293
        %p567 = pneg %p290
        %p568 = pneg %p314
        %p569 = pneg %p311
        %p570 = pneg %p335
        %p571 = pneg %p332
        %p572 = pneg %p356
        %p573 = pneg %p353
        %p574 = pneg %p377
        %p575 = pneg %p374
        %p576 = pneg %p398
        %p577 = pneg %p395
        %p578 = pneg %p424
        %p579 = pneg %p421
        %s580 = sand.u32 %s411, 1
        %s581 = scalar_lea.sflag [#allocation3], %s580
        %s582 = sand.u32 %s411, 1
        %s583 = smul.addr %s582, 16
        %s584 = scalar_lea.vmem [#allocation2], %s583
        %p585 = pneg %p450
        %p586 = pneg %p447
        %s587 = sand.u32 %s437, 1
        %s588 = scalar_lea.sflag [#allocation5], %s587
        %s589 = sand.u32 %s437, 1
        %s590 = smul.addr %s589, 16
        %s591 = scalar_lea.vmem [#allocation4], %s590
        %s592 = smul.u32 2, %s36
        %p593 = scmp.lt.s32.totalorder %s592, 3
        %s594 = scalar_select %p593, %s592, 3
        %s595 = smul.addr %s594, 8
        %s596 = scalar_lea.vmem %s0, %s595
        %s597 = smul.u32 2, %s36
        %p598 = scmp.lt.s32.totalorder %s36, 1
        %s599 = scalar_select %p598, %s36, 1
        %s600 = scalar_lea.vmem %s2, %s599
        %v602 = vld [vmem:[%s596] sm:$0xff]
        %v603 = vld [vmem:[%s596 + $0x8] sm:$0xff]
        %v604 = vlaneseq
        %v605 = vand.u32 %v604, 127
        %606 = vset.pattern.permute.xlu0 0
        %607 = vperm.xlu0 %606, %v602
        %v608 = vpop.permute.xlu0 %607
        %609 = vset.pattern.permute.xlu0 0
        %610 = vperm.xlu0 %609, %v603
        %v611 = vpop.permute.xlu0 %610
        %vm612 = vcmp.eq.s32.totalorder %v605, %v608
        %vm613 = vcmp.eq.s32.totalorder %v605, %v611
        %v614 = vsel %vm612, 1, 0
        %v615 = vsel %vm613, 1, 0
        %v616 = vcvt.s32.f32 %v614
        %v617 = vcvt.s32.f32 %v615
        %v618 = vld [vmem:[%s1] sm:$0xff]
        %v619 = vld [vmem:[%s1 + $0x8] sm:$0xff]
        %v620 = vld [vmem:[%s1 + $0x10] sm:$0xff]
        %v621 = vld [vmem:[%s1 + $0x18] sm:$0xff]
        %v622 = vld [vmem:[%s600] sm:$0x1]
        %v623 = vpack.c.bf16 %v622, %v622
        %v624 = vld [vmem:[%s3] sm:$0xf]
        %v625 = vld [vmem:[%s3 + $0x4] sm:$0xf]
        %v626 = vld [vmem:[%s4] sm:$0x1]
        %v629 = vunpack.c.l.b16 %v624
        %v630 = vunpack.c.l.b16 %v625
        %v631 = vpack.c.b16 %v630, %v629
        %vm633 = vcmask 130048
        %v635 = vsel %vm633, %v623, 0
        %637 = vmatprep.subr.bf16.mxu0 0
        %638 = vmatpush1.bf16.msra.mxu0 %v631
        %639 = vmatprep.subr.bf16.mxu0 0
        %640 = vmatpush1.bf16.msra.mxu0 0
        %641 = vmatprep.subr.bf16.mxu0 0
        %642 = vmatpush1.bf16.msra.mxu0 0
        %643 = vmatprep.subr.bf16.mxu0 0
        %644 = vmatpush1.bf16.msra.mxu0 0
        %645 = vmatprep.subr.bf16.mxu0 0
        %646 = vmatpush1.bf16.msra.mxu0 0
        %647 = vmatprep.subr.bf16.mxu0 0
        %648 = vmatpush1.bf16.msra.mxu0 0
        %649 = vmatprep.subr.bf16.mxu0 0
        %650 = vmatpush1.bf16.msra.mxu0 0
        %651 = vmatprep.subr.bf16.mxu0 0
        %652 = vmatpush1.bf16.msra.mxu0 0
        %653 = vmatprep.subr.bf16.mxu0 0
        %654 = vmatpush1.bf16.msra.mxu0 0
        %655 = vmatprep.subr.bf16.mxu0 0
        %656 = vmatpush1.bf16.msra.mxu0 0
        %657 = vmatprep.subr.bf16.mxu0 0
        %658 = vmatpush1.bf16.msra.mxu0 0
        %659 = vmatprep.subr.bf16.mxu0 0
        %660 = vmatpush1.bf16.msra.mxu0 0
        %661 = vmatprep.subr.bf16.mxu0 0
        %662 = vmatpush1.bf16.msra.mxu0 0
        %663 = vmatprep.subr.bf16.mxu0 0
        %664 = vmatpush1.bf16.msra.mxu0 0
        %665 = vmatprep.subr.bf16.mxu0 0
        %666 = vmatpush1.bf16.msra.mxu0 0
        %667 = vmatprep.subr.bf16.mxu0 0
        %668 = vmatpush1.bf16.msra.mxu0 0
        %669 = vmatprep.mubr.bf16.mxu0 0
        %670 = vmatmul.mubr.bf16.gmra.mrb[0].mxu0 %v635
        %v671 = vpop.f32.mrb[0].mxu0
        %v672 = vadd.f32 %v626, %v671
        %v673 = vpop.f32.mrb[0].mxu0
        %v674 = vpop.f32.mrb[0].mxu0
        %v675 = vpop.f32.mrb[0].mxu0
        %676 = vdwg.mxu0
        %v677 = vand.u32 2147483647, %v672
        %v678 = vadd.f32 %v677, 1.0
        %v679 = vrcp.pop %v678
        %v680 = vmul.f32 %v672, %v679
        %v681 = vlaneseq
        %v682 = vshrl.u32 %v681, 7
        %v683 = vsub.s32 0, %v682
        %v684 = vrot.slane %v680, %v683
        %vm685 = vcmask 261120
        %v687 = vsel %vm685, %v616, 0
        %v690 = vsel %vm685, %v617, 0
        %692 = vmatprep.subr.mxu0 0.0
        %693 = vmatpush1.msra.mxu0 %v618
        %694 = vmatprep.subr.mxu0 0.0
        %695 = vmatpush1.msra.mxu0 %v619
        %696 = vmatprep.subr.mxu0 0.0
        %697 = vmatpush1.msra.mxu0 %v620
        %698 = vmatprep.subr.mxu0 0.0
        %699 = vmatpush1.msra.mxu0 %v621
        %700 = vmatprep.subr.mxu0 0.0
        %701 = vmatpush1.msra.mxu0 0.0
        %702 = vmatprep.subr.mxu0 0.0
        %703 = vmatpush1.msra.mxu0 0.0
        %704 = vmatprep.subr.mxu0 0.0
        %705 = vmatpush1.msra.mxu0 0.0
        %706 = vmatprep.subr.mxu0 0.0
        %707 = vmatpush1.msra.mxu0 0.0
        %708 = vmatprep.subr.mxu0 0.0
        %709 = vmatpush1.msra.mxu0 0.0
        %710 = vmatprep.subr.mxu0 0.0
        %711 = vmatpush1.msra.mxu0 0.0
        %712 = vmatprep.subr.mxu0 0.0
        %713 = vmatpush1.msra.mxu0 0.0
        %714 = vmatprep.subr.mxu0 0.0
        %715 = vmatpush1.msra.mxu0 0.0
        %716 = vmatprep.subr.mxu0 0.0
        %717 = vmatpush1.msra.mxu0 0.0
        %718 = vmatprep.subr.mxu0 0.0
        %719 = vmatpush1.msra.mxu0 0.0
        %720 = vmatprep.subr.mxu0 0.0
        %721 = vmatpush1.msra.mxu0 0.0
        %722 = vmatprep.subr.mxu0 0.0
        %723 = vmatpush1.msra.mxu0 0.0
        %724 = vmatprep.subr.mxu0 0.0
        %725 = vmatpush1.msra.mxu0 0.0
        %726 = vmatprep.subr.mxu0 0.0
        %727 = vmatpush1.msra.mxu0 0.0
        %728 = vmatprep.subr.mxu0 0.0
        %729 = vmatpush1.msra.mxu0 0.0
        %730 = vmatprep.subr.mxu0 0.0
        %731 = vmatpush1.msra.mxu0 0.0
        %732 = vmatprep.subr.mxu0 0.0
        %733 = vmatpush1.msra.mxu0 0.0
        %734 = vmatprep.subr.mxu0 0.0
        %735 = vmatpush1.msra.mxu0 0.0
        %736 = vmatprep.subr.mxu0 0.0
        %737 = vmatpush1.msra.mxu0 0.0
        %738 = vmatprep.subr.mxu0 0.0
        %739 = vmatpush1.msra.mxu0 0.0
        %740 = vmatprep.subr.mxu0 0.0
        %741 = vmatpush1.msra.mxu0 0.0
        %742 = vmatprep.subr.mxu0 0.0
        %743 = vmatpush1.msra.mxu0 0.0
        %744 = vmatprep.subr.mxu0 0.0
        %745 = vmatpush1.msra.mxu0 0.0
        %746 = vmatprep.subr.mxu0 0.0
        %747 = vmatpush1.msra.mxu0 0.0
        %748 = vmatprep.subr.mxu0 0.0
        %749 = vmatpush1.msra.mxu0 0.0
        %750 = vmatprep.subr.mxu0 0.0
        %751 = vmatpush1.msra.mxu0 0.0
        %752 = vmatprep.subr.mxu0 0.0
        %753 = vmatpush1.msra.mxu0 0.0
        %754 = vmatprep.subr.mxu0 0.0
        %755 = vmatpush1.msra.mxu0 0.0
        %756 = vmatprep.mubr.f32.mxu0 0.0
        %757 = vmatmul.mubr.f32.gmra.mrb[0].mxu0 %v687
        %v758 = vpop.f32.mrb[0].mxu0
        %v759 = vadd.f32 %v684, %v758
        %v760 = vpop.f32.mrb[0].mxu0
        %761 = vmatprep.mubr.f32.mxu0 0.0
        %762 = vmatmul.mubr.f32.gmra.mrb[0].mxu0 %v690
        %v763 = vpop.f32.mrb[0].mxu0
        %v764 = vadd.f32 %v684, %v763
        %v765 = vpop.f32.mrb[0].mxu0
        %766 = vdwg.mxu0
        %v767 = vpack.c.bf16 %v764, %v759
        %v768 = vld [vmem:[%s5] sm:$0xf]
        %v769 = vld [vmem:[%s5 + $0x4] sm:$0xf]
        %v770 = vld [vmem:[%s5 + $0x8] sm:$0xf]
        %v771 = vld [vmem:[%s5 + $0xc] sm:$0xf]
        %v772 = vld [vmem:[%s6] sm:$0x1]
        %v774 = vlaneseq
        %v775 = vshrl.u32 %v774, 7
        %v776 = vsub.s32 0, %v775
        %v777 = vrot.slane %v772, %v776
        %v783 = vunpack.c.l.b16 %v768
        %v784 = vunpack.c.l.b16 %v769
        %v785 = vunpack.c.l.b16 %v770
        %v786 = vunpack.c.l.b16 %v771
        %v787 = vpack.c.b16 %v784, %v783
        %v788 = vpack.c.b16 %v786, %v785
        %v792 = vsel %vm685, %v767, 0
        %794 = vmatprep.subr.bf16.mxu0 0
        %795 = vmatpush1.bf16.msra.mxu0 %v787
        %796 = vmatprep.subr.bf16.mxu0 0
        %797 = vmatpush1.bf16.msra.mxu0 %v788
        %798 = vmatprep.subr.bf16.mxu0 0
        %799 = vmatpush1.bf16.msra.mxu0 0
        %800 = vmatprep.subr.bf16.mxu0 0
        %801 = vmatpush1.bf16.msra.mxu0 0
        %802 = vmatprep.subr.bf16.mxu0 0
        %803 = vmatpush1.bf16.msra.mxu0 0
        %804 = vmatprep.subr.bf16.mxu0 0
        %805 = vmatpush1.bf16.msra.mxu0 0
        %806 = vmatprep.subr.bf16.mxu0 0
        %807 = vmatpush1.bf16.msra.mxu0 0
        %808 = vmatprep.subr.bf16.mxu0 0
        %809 = vmatpush1.bf16.msra.mxu0 0
        %810 = vmatprep.subr.bf16.mxu0 0
        %811 = vmatpush1.bf16.msra.mxu0 0
        %812 = vmatprep.subr.bf16.mxu0 0
        %813 = vmatpush1.bf16.msra.mxu0 0
        %814 = vmatprep.subr.bf16.mxu0 0
        %815 = vmatpush1.bf16.msra.mxu0 0
        %816 = vmatprep.subr.bf16.mxu0 0
        %817 = vmatpush1.bf16.msra.mxu0 0
        %818 = vmatprep.subr.bf16.mxu0 0
        %819 = vmatpush1.bf16.msra.mxu0 0
        %820 = vmatprep.subr.bf16.mxu0 0
        %821 = vmatpush1.bf16.msra.mxu0 0
        %822 = vmatprep.subr.bf16.mxu0 0
        %823 = vmatpush1.bf16.msra.mxu0 0
        %824 = vmatprep.subr.bf16.mxu0 0
        %825 = vmatpush1.bf16.msra.mxu0 0
        %826 = vmatprep.mubr.bf16.mxu0 0
        %827 = vmatmul.mubr.bf16.gmra.mrb[0].mxu0 %v792
        %v828 = vpop.f32.mrb[0].mxu0
        %v829 = vadd.f32 %v777, %v828
        %v830 = vpop.f32.mrb[0].mxu0
        %v831 = vpop.f32.mrb[0].mxu0
        %v832 = vadd.f32 %v777, %v831
        %v833 = vpop.f32.mrb[0].mxu0
        %834 = vdwg.mxu0
        %v835 = vmax.f32 %v829, 0.0
        %v836 = vmax.f32 %v832, 0.0
        %vm839 = vcmask 1040384
        %v840 = vrot.slane %v835, 7
        %v841 = vrot.slane %v836, 7
        %v842 = vsel %vm839, %v840, %v841
        %v845 = vsel %vm839, 0.0, %v840
        %vm846 = vcmask 1046528
        %v847 = vrot.slane %v835, 1
        %v848 = vrot.slane %v836, 1
        %v849 = vsel %vm846, %v847, %v848
        %v852 = vsel %vm846, %v848, 0.0
        %853 = vrot.lane.b32.xlu0 %v835, 64
        %v854 = vpop.permute.xlu0 %853
        %855 = vrot.lane.b32.xlu0 %v836, 64
        %v856 = vpop.permute.xlu0 %855
        %vm859 = vcmask 523264
        %v860 = vsel %vm859, %v845, %v854
        %v861 = vsel %vm859, %v842, %v856
        %v862 = vpack.c.bf16 %v861, %v860
        %v863 = vpack.c.bf16 %v852, %v849
        %v864 = vld [vmem:[%s7] sm:$0xf]
        %v865 = vld [vmem:[%s7 + $0x4] sm:$0xf]
        %v866 = vld [vmem:[%s7 + $0x8] sm:$0xf]
        %v867 = vld [vmem:[%s7 + $0xc] sm:$0xf]
        %v868 = vld [vmem:[%s7 + $0x10] sm:$0xf]
        %v869 = vld [vmem:[%s7 + $0x14] sm:$0xf]
        %v870 = vld [vmem:[%s7 + $0x18] sm:$0xf]
        %v871 = vld [vmem:[%s7 + $0x1c] sm:$0xf]
        %v872 = vld [vmem:[%s7 + $0x20] sm:$0xf]
        %v873 = vld [vmem:[%s7 + $0x24] sm:$0xf]
        %v874 = vld [vmem:[%s7 + $0x28] sm:$0xf]
        %v875 = vld [vmem:[%s7 + $0x2c] sm:$0xf]
        %v876 = vld [vmem:[%s7 + $0x30] sm:$0xf]
        %v877 = vld [vmem:[%s7 + $0x34] sm:$0xf]
        %v878 = vld [vmem:[%s7 + $0x38] sm:$0xf]
        %v879 = vld [vmem:[%s7 + $0x3c] sm:$0xf]
        %v880 = vld [vmem:[%s7 + $0x40] sm:$0xf]
        %v881 = vld [vmem:[%s7 + $0x44] sm:$0xf]
        %v882 = vld [vmem:[%s7 + $0x48] sm:$0xf]
        %v883 = vld [vmem:[%s7 + $0x4c] sm:$0xf]
        %v884 = vld [vmem:[%s7 + $0x50] sm:$0xf]
        %v885 = vld [vmem:[%s7 + $0x54] sm:$0xf]
        %v886 = vld [vmem:[%s7 + $0x58] sm:$0xf]
        %v887 = vld [vmem:[%s7 + $0x5c] sm:$0xf]
        %v888 = vld [vmem:[%s8] sm:$0x1]
        %v890 = vlaneseq
        %v891 = vshrl.u32 %v890, 7
        %v892 = vsub.s32 0, %v891
        %v893 = vrot.slane %v888, %v892
        %v919 = vunpack.c.l.b16 %v864
        %v920 = vunpack.c.l.b16 %v865
        %v921 = vunpack.c.l.b16 %v866
        %v922 = vunpack.c.l.b16 %v867
        %v923 = vunpack.c.l.b16 %v868
        %v924 = vunpack.c.l.b16 %v869
        %v925 = vunpack.c.l.b16 %v870
        %v926 = vunpack.c.l.b16 %v871
        %v927 = vunpack.c.l.b16 %v872
        %v928 = vunpack.c.l.b16 %v873
        %v929 = vunpack.c.l.b16 %v874
        %v930 = vunpack.c.l.b16 %v875
        %v931 = vunpack.c.l.b16 %v876
        %v932 = vunpack.c.l.b16 %v877
        %v933 = vunpack.c.l.b16 %v878
        %v934 = vunpack.c.l.b16 %v879
        %v935 = vunpack.c.l.b16 %v880
        %v936 = vunpack.c.l.b16 %v881
        %v937 = vunpack.c.l.b16 %v882
        %v938 = vunpack.c.l.b16 %v883
        %v939 = vunpack.c.l.b16 %v884
        %v940 = vunpack.c.l.b16 %v885
        %v941 = vunpack.c.l.b16 %v886
        %v942 = vunpack.c.l.b16 %v887
        %v943 = vpack.c.b16 %v920, %v919
        %v944 = vpack.c.b16 %v922, %v921
        %v945 = vpack.c.b16 %v924, %v923
        %v946 = vpack.c.b16 %v926, %v925
        %v947 = vpack.c.b16 %v928, %v927
        %v948 = vpack.c.b16 %v930, %v929
        %v949 = vpack.c.b16 %v932, %v931
        %v950 = vpack.c.b16 %v934, %v933
        %v951 = vpack.c.b16 %v936, %v935
        %v952 = vpack.c.b16 %v938, %v937
        %v953 = vpack.c.b16 %v940, %v939
        %v954 = vpack.c.b16 %v942, %v941
        %v968 = vsel %vm859, %v863, 0
        %970 = vmatprep.subr.bf16.mxu0 0
        %971 = vmatpush1.bf16.msra.mxu0 %v943
        %972 = vmatprep.subr.bf16.mxu0 0
        %973 = vmatpush1.bf16.msra.mxu0 %v944
        %974 = vmatprep.subr.bf16.mxu0 0
        %975 = vmatpush1.bf16.msra.mxu0 %v945
        %976 = vmatprep.subr.bf16.mxu0 0
        %977 = vmatpush1.bf16.msra.mxu0 %v946
        %978 = vmatprep.subr.bf16.mxu0 0
        %979 = vmatpush1.bf16.msra.mxu0 %v947
        %980 = vmatprep.subr.bf16.mxu0 0
        %981 = vmatpush1.bf16.msra.mxu0 %v948
        %982 = vmatprep.subr.bf16.mxu0 0
        %983 = vmatpush1.bf16.msra.mxu0 %v949
        %984 = vmatprep.subr.bf16.mxu0 0
        %985 = vmatpush1.bf16.msra.mxu0 %v950
        %986 = vmatprep.subr.bf16.mxu0 0
        %987 = vmatpush1.bf16.msra.mxu0 %v951
        %988 = vmatprep.subr.bf16.mxu0 0
        %989 = vmatpush1.bf16.msra.mxu0 %v952
        %990 = vmatprep.subr.bf16.mxu0 0
        %991 = vmatpush1.bf16.msra.mxu0 %v953
        %992 = vmatprep.subr.bf16.mxu0 0
        %993 = vmatpush1.bf16.msra.mxu0 %v954
        %994 = vmatprep.subr.bf16.mxu0 0
        %995 = vmatpush1.bf16.msra.mxu0 0
        %996 = vmatprep.subr.bf16.mxu0 0
        %997 = vmatpush1.bf16.msra.mxu0 0
        %998 = vmatprep.subr.bf16.mxu0 0
        %999 = vmatpush1.bf16.msra.mxu0 0
        %1000 = vmatprep.subr.bf16.mxu0 0
        %1001 = vmatpush1.bf16.msra.mxu0 0
        %1002 = vmatprep.mubr.bf16.mxu0 %v968
        %1003 = vmatmul.mubr.bf16.gmra.mrb[0].mxu0 %v862
        %v1004 = vpop.f32.mrb[0].mxu0
        %v1005 = vadd.f32 %v893, %v1004
        %v1006 = vpop.f32.mrb[0].mxu0
        %v1007 = vpop.f32.mrb[0].mxu0
        %v1008 = vadd.f32 %v893, %v1007
        %v1009 = vpop.f32.mrb[0].mxu0
        %1010 = vdwg.mxu0
        %vm1013 = vcmask 1041408
        %v1014 = vrot.slane %v1005, 6
        %v1015 = vrot.slane %v1008, 6
        %v1016 = vsel %vm1013, %v1014, %v1015
        %v1019 = vsel %vm1013, 0.0, %v1014
        %vm1020 = vcmask 1045504
        %v1021 = vrot.slane %v1005, 2
        %v1022 = vrot.slane %v1008, 2
        %v1023 = vsel %vm1020, %v1021, %v1022
        %v1026 = vsel %vm1020, %v1022, 0.0
        %1027 = vrot.lane.b32.xlu0 %v1005, 64
        %v1028 = vpop.permute.xlu0 %1027
        %1029 = vrot.lane.b32.xlu0 %v1008, 64
        %v1030 = vpop.permute.xlu0 %1029
        %v1033 = vsel %vm859, %v1019, %v1028
        %v1034 = vsel %vm859, %v1016, %v1030
        %v1035 = vpack.c.bf16 %v1034, %v1033
        %v1036 = vpack.c.bf16 %v1026, %v1023
        %v1037 = vld [vmem:[%s9] sm:$0xf]
        %v1038 = vld [vmem:[%s9 + $0x4] sm:$0xf]
        %v1039 = vld [vmem:[%s9 + $0x8] sm:$0xf]
        %v1040 = vld [vmem:[%s9 + $0xc] sm:$0xf]
        %v1041 = vld [vmem:[%s9 + $0x10] sm:$0xf]
        %v1042 = vld [vmem:[%s9 + $0x14] sm:$0xf]
        %v1043 = vld [vmem:[%s9 + $0x18] sm:$0xf]
        %v1044 = vld [vmem:[%s9 + $0x1c] sm:$0xf]
        %v1045 = vld [vmem:[%s9 + $0x20] sm:$0xf]
        %v1046 = vld [vmem:[%s9 + $0x24] sm:$0xf]
        %v1047 = vld [vmem:[%s9 + $0x28] sm:$0xf]
        %v1048 = vld [vmem:[%s9 + $0x2c] sm:$0xf]
        %v1049 = vld [vmem:[%s9 + $0x30] sm:$0xf]
        %v1050 = vld [vmem:[%s9 + $0x34] sm:$0xf]
        %v1051 = vld [vmem:[%s9 + $0x38] sm:$0xf]
        %v1052 = vld [vmem:[%s9 + $0x3c] sm:$0xf]
        %v1053 = vld [vmem:[%s9 + $0x40] sm:$0xf]
        %v1054 = vld [vmem:[%s9 + $0x44] sm:$0xf]
        %v1055 = vld [vmem:[%s9 + $0x48] sm:$0xf]
        %v1056 = vld [vmem:[%s9 + $0x4c] sm:$0xf]
        %v1057 = vld [vmem:[%s9 + $0x50] sm:$0xf]
        %v1058 = vld [vmem:[%s9 + $0x54] sm:$0xf]
        %v1059 = vld [vmem:[%s9 + $0x58] sm:$0xf]
        %v1060 = vld [vmem:[%s9 + $0x5c] sm:$0xf]
        %v1061 = vld [vmem:[%s10] sm:$0x1]
        %v1063 = vlaneseq
        %v1064 = vshrl.u32 %v1063, 7
        %v1065 = vsub.s32 0, %v1064
        %v1066 = vrot.slane %v1061, %v1065
        %v1092 = vunpack.c.l.b16 %v1037
        %v1093 = vunpack.c.l.b16 %v1038
        %v1094 = vunpack.c.l.b16 %v1039
        %v1095 = vunpack.c.l.b16 %v1040
        %v1096 = vunpack.c.l.b16 %v1041
        %v1097 = vunpack.c.l.b16 %v1042
        %v1098 = vunpack.c.l.b16 %v1043
        %v1099 = vunpack.c.l.b16 %v1044
        %v1100 = vunpack.c.l.b16 %v1045
        %v1101 = vunpack.c.l.b16 %v1046
        %v1102 = vunpack.c.l.b16 %v1047
        %v1103 = vunpack.c.l.b16 %v1048
        %v1104 = vunpack.c.l.b16 %v1049
        %v1105 = vunpack.c.l.b16 %v1050
        %v1106 = vunpack.c.l.b16 %v1051
        %v1107 = vunpack.c.l.b16 %v1052
        %v1108 = vunpack.c.l.b16 %v1053
        %v1109 = vunpack.c.l.b16 %v1054
        %v1110 = vunpack.c.l.b16 %v1055
        %v1111 = vunpack.c.l.b16 %v1056
        %v1112 = vunpack.c.l.b16 %v1057
        %v1113 = vunpack.c.l.b16 %v1058
        %v1114 = vunpack.c.l.b16 %v1059
        %v1115 = vunpack.c.l.b16 %v1060
        %v1116 = vpack.c.b16 %v1093, %v1092
        %v1117 = vpack.c.b16 %v1095, %v1094
        %v1118 = vpack.c.b16 %v1097, %v1096
        %v1119 = vpack.c.b16 %v1099, %v1098
        %v1120 = vpack.c.b16 %v1101, %v1100
        %v1121 = vpack.c.b16 %v1103, %v1102
        %v1122 = vpack.c.b16 %v1105, %v1104
        %v1123 = vpack.c.b16 %v1107, %v1106
        %v1124 = vpack.c.b16 %v1109, %v1108
        %v1125 = vpack.c.b16 %v1111, %v1110
        %v1126 = vpack.c.b16 %v1113, %v1112
        %v1127 = vpack.c.b16 %v1115, %v1114
        %v1141 = vsel %vm859, %v1036, 0
        %1143 = vmatprep.subr.bf16.mxu0 0
        %1144 = vmatpush1.bf16.msra.mxu0 %v1116
        %1145 = vmatprep.subr.bf16.mxu0 0
        %1146 = vmatpush1.bf16.msra.mxu0 %v1117
        %1147 = vmatprep.subr.bf16.mxu0 0
        %1148 = vmatpush1.bf16.msra.mxu0 %v1118
        %1149 = vmatprep.subr.bf16.mxu0 0
        %1150 = vmatpush1.bf16.msra.mxu0 %v1119
        %1151 = vmatprep.subr.bf16.mxu0 0
        %1152 = vmatpush1.bf16.msra.mxu0 %v1120
        %1153 = vmatprep.subr.bf16.mxu0 0
        %1154 = vmatpush1.bf16.msra.mxu0 %v1121
        %1155 = vmatprep.subr.bf16.mxu0 0
        %1156 = vmatpush1.bf16.msra.mxu0 %v1122
        %1157 = vmatprep.subr.bf16.mxu0 0
        %1158 = vmatpush1.bf16.msra.mxu0 %v1123
        %1159 = vmatprep.subr.bf16.mxu0 0
        %1160 = vmatpush1.bf16.msra.mxu0 %v1124
        %1161 = vmatprep.subr.bf16.mxu0 0
        %1162 = vmatpush1.bf16.msra.mxu0 %v1125
        %1163 = vmatprep.subr.bf16.mxu0 0
        %1164 = vmatpush1.bf16.msra.mxu0 %v1126
        %1165 = vmatprep.subr.bf16.mxu0 0
        %1166 = vmatpush1.bf16.msra.mxu0 %v1127
        %1167 = vmatprep.subr.bf16.mxu0 0
        %1168 = vmatpush1.bf16.msra.mxu0 0
        %1169 = vmatprep.subr.bf16.mxu0 0
        %1170 = vmatpush1.bf16.msra.mxu0 0
        %1171 = vmatprep.subr.bf16.mxu0 0
        %1172 = vmatpush1.bf16.msra.mxu0 0
        %1173 = vmatprep.subr.bf16.mxu0 0
        %1174 = vmatpush1.bf16.msra.mxu0 0
        %1175 = vmatprep.mubr.bf16.mxu0 %v1141
        %1176 = vmatmul.mubr.bf16.gmra.mrb[0].mxu0 %v1035
        %v1177 = vpop.f32.mrb[0].mxu0
        %v1178 = vadd.f32 %v1066, %v1177
        %v1179 = vpop.f32.mrb[0].mxu0
        %v1180 = vpop.f32.mrb[0].mxu0
        %v1181 = vadd.f32 %v1066, %v1180
        %v1182 = vpop.f32.mrb[0].mxu0
        %1183 = vdwg.mxu0
        %vm1186 = vcmask 1043456
        %v1187 = vrot.slane %v1178, 4
        %v1188 = vrot.slane %v1181, 4
        %v1189 = vsel %vm1186, %v1187, %v1188
        %v1192 = vsel %vm1186, 0.0, %v1187
        %v1194 = vsel %vm1186, %v1188, 0.0
        %1195 = vrot.lane.b32.xlu0 %v1178, 64
        %v1196 = vpop.permute.xlu0 %1195
        %1197 = vrot.lane.b32.xlu0 %v1181, 64
        %v1198 = vpop.permute.xlu0 %1197
        %v1201 = vsel %vm859, %v1192, %v1196
        %v1202 = vsel %vm859, %v1189, %v1198
        %v1203 = vpack.c.bf16 %v1202, %v1201
        %v1204 = vpack.c.bf16 %v1194, %v1189
        %v1205 = vld [vmem:[%s11] sm:$0xf]
        %v1206 = vld [vmem:[%s11 + $0x4] sm:$0xf]
        %v1207 = vld [vmem:[%s11 + $0x8] sm:$0xf]
        %v1208 = vld [vmem:[%s11 + $0xc] sm:$0xf]
        %v1209 = vld [vmem:[%s11 + $0x10] sm:$0xf]
        %v1210 = vld [vmem:[%s11 + $0x14] sm:$0xf]
        %v1211 = vld [vmem:[%s11 + $0x18] sm:$0xf]
        %v1212 = vld [vmem:[%s11 + $0x1c] sm:$0xf]
        %v1213 = vld [vmem:[%s11 + $0x20] sm:$0xf]
        %v1214 = vld [vmem:[%s11 + $0x24] sm:$0xf]
        %v1215 = vld [vmem:[%s11 + $0x28] sm:$0xf]
        %v1216 = vld [vmem:[%s11 + $0x2c] sm:$0xf]
        %v1217 = vld [vmem:[%s11 + $0x30] sm:$0xf]
        %v1218 = vld [vmem:[%s11 + $0x34] sm:$0xf]
        %v1219 = vld [vmem:[%s11 + $0x38] sm:$0xf]
        %v1220 = vld [vmem:[%s11 + $0x3c] sm:$0xf]
        %v1221 = vld [vmem:[%s11 + $0x40] sm:$0xf]
        %v1222 = vld [vmem:[%s11 + $0x44] sm:$0xf]
        %v1223 = vld [vmem:[%s11 + $0x48] sm:$0xf]
        %v1224 = vld [vmem:[%s11 + $0x4c] sm:$0xf]
        %v1225 = vld [vmem:[%s11 + $0x50] sm:$0xf]
        %v1226 = vld [vmem:[%s11 + $0x54] sm:$0xf]
        %v1227 = vld [vmem:[%s11 + $0x58] sm:$0xf]
        %v1228 = vld [vmem:[%s11 + $0x5c] sm:$0xf]
        %v1229 = vld [vmem:[%s12] sm:$0x1]
        %v1231 = vlaneseq
        %v1232 = vshrl.u32 %v1231, 7
        %v1233 = vsub.s32 0, %v1232
        %v1234 = vrot.slane %v1229, %v1233
        %v1260 = vunpack.c.l.b16 %v1205
        %v1261 = vunpack.c.l.b16 %v1206
        %v1262 = vunpack.c.l.b16 %v1207
        %v1263 = vunpack.c.l.b16 %v1208
        %v1264 = vunpack.c.l.b16 %v1209
        %v1265 = vunpack.c.l.b16 %v1210
        %v1266 = vunpack.c.l.b16 %v1211
        %v1267 = vunpack.c.l.b16 %v1212
        %v1268 = vunpack.c.l.b16 %v1213
        %v1269 = vunpack.c.l.b16 %v1214
        %v1270 = vunpack.c.l.b16 %v1215
        %v1271 = vunpack.c.l.b16 %v1216
        %v1272 = vunpack.c.l.b16 %v1217
        %v1273 = vunpack.c.l.b16 %v1218
        %v1274 = vunpack.c.l.b16 %v1219
        %v1275 = vunpack.c.l.b16 %v1220
        %v1276 = vunpack.c.l.b16 %v1221
        %v1277 = vunpack.c.l.b16 %v1222
        %v1278 = vunpack.c.l.b16 %v1223
        %v1279 = vunpack.c.l.b16 %v1224
        %v1280 = vunpack.c.l.b16 %v1225
        %v1281 = vunpack.c.l.b16 %v1226
        %v1282 = vunpack.c.l.b16 %v1227
        %v1283 = vunpack.c.l.b16 %v1228
        %v1284 = vpack.c.b16 %v1261, %v1260
        %v1285 = vpack.c.b16 %v1263, %v1262
        %v1286 = vpack.c.b16 %v1265, %v1264
        %v1287 = vpack.c.b16 %v1267, %v1266
        %v1288 = vpack.c.b16 %v1269, %v1268
        %v1289 = vpack.c.b16 %v1271, %v1270
        %v1290 = vpack.c.b16 %v1273, %v1272
        %v1291 = vpack.c.b16 %v1275, %v1274
        %v1292 = vpack.c.b16 %v1277, %v1276
        %v1293 = vpack.c.b16 %v1279, %v1278
        %v1294 = vpack.c.b16 %v1281, %v1280
        %v1295 = vpack.c.b16 %v1283, %v1282
        %v1309 = vsel %vm859, %v1204, 0
        %1311 = vmatprep.subr.bf16.mxu0 0
        %1312 = vmatpush1.bf16.msra.mxu0 %v1284
        %1313 = vmatprep.subr.bf16.mxu0 0
        %1314 = vmatpush1.bf16.msra.mxu0 %v1285
        %1315 = vmatprep.subr.bf16.mxu0 0
        %1316 = vmatpush1.bf16.msra.mxu0 %v1286
        %1317 = vmatprep.subr.bf16.mxu0 0
        %1318 = vmatpush1.bf16.msra.mxu0 %v1287
        %1319 = vmatprep.subr.bf16.mxu0 0
        %1320 = vmatpush1.bf16.msra.mxu0 %v1288
        %1321 = vmatprep.subr.bf16.mxu0 0
        %1322 = vmatpush1.bf16.msra.mxu0 %v1289
        %1323 = vmatprep.subr.bf16.mxu0 0
        %1324 = vmatpush1.bf16.msra.mxu0 %v1290
        %1325 = vmatprep.subr.bf16.mxu0 0
        %1326 = vmatpush1.bf16.msra.mxu0 %v1291
        %1327 = vmatprep.subr.bf16.mxu0 0
        %1328 = vmatpush1.bf16.msra.mxu0 %v1292
        %1329 = vmatprep.subr.bf16.mxu0 0
        %1330 = vmatpush1.bf16.msra.mxu0 %v1293
        %1331 = vmatprep.subr.bf16.mxu0 0
        %1332 = vmatpush1.bf16.msra.mxu0 %v1294
        %1333 = vmatprep.subr.bf16.mxu0 0
        %1334 = vmatpush1.bf16.msra.mxu0 %v1295
        %1335 = vmatprep.subr.bf16.mxu0 0
        %1336 = vmatpush1.bf16.msra.mxu0 0
        %1337 = vmatprep.subr.bf16.mxu0 0
        %1338 = vmatpush1.bf16.msra.mxu0 0
        %1339 = vmatprep.subr.bf16.mxu0 0
        %1340 = vmatpush1.bf16.msra.mxu0 0
        %1341 = vmatprep.subr.bf16.mxu0 0
        %1342 = vmatpush1.bf16.msra.mxu0 0
        %1343 = vmatprep.mubr.bf16.mxu0 %v1309
        %1344 = vmatmul.mubr.bf16.gmra.mrb[0].mxu0 %v1203
        %v1345 = vpop.f32.mrb[0].mxu0
        %v1346 = vadd.f32 %v1234, %v1345
        %v1347 = vpop.f32.mrb[0].mxu0
        %v1348 = vpop.f32.mrb[0].mxu0
        %v1349 = vadd.f32 %v1234, %v1348
        %v1350 = vpop.f32.mrb[0].mxu0
        %1351 = vdwg.mxu0
        %1354 = vrot.lane.b32.xlu0 %v1346, 64
        %v1355 = vpop.permute.xlu0 %1354
        %1356 = vrot.lane.b32.xlu0 %v1349, 64
        %v1357 = vpop.permute.xlu0 %1356
        %v1360 = vsel %vm859, 0.0, %v1355
        %v1361 = vsel %vm859, %v1346, %v1357
        %v1362 = vpack.c.bf16 %v1361, %v1360
        %v1363 = vpack.c.bf16 0.0, %v1349
        %v1364 = vld [vmem:[%s13] sm:$0xf]
        %v1365 = vld [vmem:[%s13 + $0x4] sm:$0xf]
        %v1366 = vld [vmem:[%s13 + $0x8] sm:$0xf]
        %v1367 = vld [vmem:[%s13 + $0xc] sm:$0xf]
        %v1368 = vld [vmem:[%s13 + $0x10] sm:$0xf]
        %v1369 = vld [vmem:[%s13 + $0x14] sm:$0xf]
        %v1370 = vld [vmem:[%s13 + $0x18] sm:$0xf]
        %v1371 = vld [vmem:[%s13 + $0x1c] sm:$0xf]
        %v1372 = vld [vmem:[%s13 + $0x20] sm:$0xf]
        %v1373 = vld [vmem:[%s13 + $0x24] sm:$0xf]
        %v1374 = vld [vmem:[%s13 + $0x28] sm:$0xf]
        %v1375 = vld [vmem:[%s13 + $0x2c] sm:$0xf]
        %v1376 = vld [vmem:[%s13 + $0x30] sm:$0xf]
        %v1377 = vld [vmem:[%s13 + $0x34] sm:$0xf]
        %v1378 = vld [vmem:[%s13 + $0x38] sm:$0xf]
        %v1379 = vld [vmem:[%s13 + $0x3c] sm:$0xf]
        %v1380 = vld [vmem:[%s13 + $0x40] sm:$0xf]
        %v1381 = vld [vmem:[%s13 + $0x44] sm:$0xf]
        %v1382 = vld [vmem:[%s13 + $0x48] sm:$0xf]
        %v1383 = vld [vmem:[%s13 + $0x4c] sm:$0xf]
        %v1384 = vld [vmem:[%s13 + $0x50] sm:$0xf]
        %v1385 = vld [vmem:[%s13 + $0x54] sm:$0xf]
        %v1386 = vld [vmem:[%s13 + $0x58] sm:$0xf]
        %v1387 = vld [vmem:[%s13 + $0x5c] sm:$0xf]
        %v1388 = vld [vmem:[%s14] sm:$0x1]
        %v1390 = vlaneseq
        %v1391 = vshrl.u32 %v1390, 7
        %v1392 = vsub.s32 0, %v1391
        %v1393 = vrot.slane %v1388, %v1392
        %v1419 = vunpack.c.l.b16 %v1364
        %v1420 = vunpack.c.l.b16 %v1365
        %v1421 = vunpack.c.l.b16 %v1366
        %v1422 = vunpack.c.l.b16 %v1367
        %v1423 = vunpack.c.l.b16 %v1368
        %v1424 = vunpack.c.l.b16 %v1369
        %v1425 = vunpack.c.l.b16 %v1370
        %v1426 = vunpack.c.l.b16 %v1371
        %v1427 = vunpack.c.l.b16 %v1372
        %v1428 = vunpack.c.l.b16 %v1373
        %v1429 = vunpack.c.l.b16 %v1374
        %v1430 = vunpack.c.l.b16 %v1375
        %v1431 = vunpack.c.l.b16 %v1376
        %v1432 = vunpack.c.l.b16 %v1377
        %v1433 = vunpack.c.l.b16 %v1378
        %v1434 = vunpack.c.l.b16 %v1379
        %v1435 = vunpack.c.l.b16 %v1380
        %v1436 = vunpack.c.l.b16 %v1381
        %v1437 = vunpack.c.l.b16 %v1382
        %v1438 = vunpack.c.l.b16 %v1383
        %v1439 = vunpack.c.l.b16 %v1384
        %v1440 = vunpack.c.l.b16 %v1385
        %v1441 = vunpack.c.l.b16 %v1386
        %v1442 = vunpack.c.l.b16 %v1387
        %v1443 = vpack.c.b16 %v1420, %v1419
        %v1444 = vpack.c.b16 %v1422, %v1421
        %v1445 = vpack.c.b16 %v1424, %v1423
        %v1446 = vpack.c.b16 %v1426, %v1425
        %v1447 = vpack.c.b16 %v1428, %v1427
        %v1448 = vpack.c.b16 %v1430, %v1429
        %v1449 = vpack.c.b16 %v1432, %v1431
        %v1450 = vpack.c.b16 %v1434, %v1433
        %v1451 = vpack.c.b16 %v1436, %v1435
        %v1452 = vpack.c.b16 %v1438, %v1437
        %v1453 = vpack.c.b16 %v1440, %v1439
        %v1454 = vpack.c.b16 %v1442, %v1441
        %v1468 = vsel %vm859, %v1363, 0
        %1470 = vmatprep.subr.bf16.mxu0 0
        %1471 = vmatpush1.bf16.msra.mxu0 %v1443
        %1472 = vmatprep.subr.bf16.mxu0 0
        %1473 = vmatpush1.bf16.msra.mxu0 %v1444
        %1474 = vmatprep.subr.bf16.mxu0 0
        %1475 = vmatpush1.bf16.msra.mxu0 %v1445
        %1476 = vmatprep.subr.bf16.mxu0 0
        %1477 = vmatpush1.bf16.msra.mxu0 %v1446
        %1478 = vmatprep.subr.bf16.mxu0 0
        %1479 = vmatpush1.bf16.msra.mxu0 %v1447
        %1480 = vmatprep.subr.bf16.mxu0 0
        %1481 = vmatpush1.bf16.msra.mxu0 %v1448
        %1482 = vmatprep.subr.bf16.mxu0 0
        %1483 = vmatpush1.bf16.msra.mxu0 %v1449
        %1484 = vmatprep.subr.bf16.mxu0 0
        %1485 = vmatpush1.bf16.msra.mxu0 %v1450
        %1486 = vmatprep.subr.bf16.mxu0 0
        %1487 = vmatpush1.bf16.msra.mxu0 %v1451
        %1488 = vmatprep.subr.bf16.mxu0 0
        %1489 = vmatpush1.bf16.msra.mxu0 %v1452
        %1490 = vmatprep.subr.bf16.mxu0 0
        %1491 = vmatpush1.bf16.msra.mxu0 %v1453
        %1492 = vmatprep.subr.bf16.mxu0 0
        %1493 = vmatpush1.bf16.msra.mxu0 %v1454
        %1494 = vmatprep.subr.bf16.mxu0 0
        %1495 = vmatpush1.bf16.msra.mxu0 0
        %1496 = vmatprep.subr.bf16.mxu0 0
        %1497 = vmatpush1.bf16.msra.mxu0 0
        %1498 = vmatprep.subr.bf16.mxu0 0
        %1499 = vmatpush1.bf16.msra.mxu0 0
        %1500 = vmatprep.subr.bf16.mxu0 0
        %1501 = vmatpush1.bf16.msra.mxu0 0
        %1502 = vmatprep.mubr.bf16.mxu0 %v1468
        %1503 = vmatmul.mubr.bf16.gmra.mrb[0].mxu0 %v1362
        %v1504 = vpop.f32.mrb[0].mxu0
        %v1505 = vadd.f32 %v1393, %v1504
        %v1506 = vpop.f32.mrb[0].mxu0
        %v1507 = vpop.f32.mrb[0].mxu0
        %v1508 = vadd.f32 %v1393, %v1507
        %v1509 = vpop.f32.mrb[0].mxu0
        %1510 = vdwg.mxu0
        %v1511 = vpack.c.bf16 %v1508, %v1505
        %v1512 = vld [vmem:[%s15] sm:$0xf]
        %v1513 = vld [vmem:[%s15 + $0x4] sm:$0xf]
        %v1514 = vld [vmem:[%s15 + $0x8] sm:$0xf]
        %v1515 = vld [vmem:[%s15 + $0xc] sm:$0xf]
        %v1516 = vld [vmem:[%s15 + $0x10] sm:$0xf]
        %v1517 = vld [vmem:[%s15 + $0x14] sm:$0xf]
        %v1518 = vld [vmem:[%s15 + $0x18] sm:$0xf]
        %v1519 = vld [vmem:[%s15 + $0x1c] sm:$0xf]
        %v1520 = vld [vmem:[%s16] sm:$0x1]
        %v1522 = vlaneseq
        %v1523 = vshrl.u32 %v1522, 7
        %v1524 = vsub.s32 0, %v1523
        %v1525 = vrot.slane %v1520, %v1524
        %v1535 = vunpack.c.l.b16 %v1512
        %v1536 = vunpack.c.l.b16 %v1513
        %v1537 = vunpack.c.l.b16 %v1514
        %v1538 = vunpack.c.l.b16 %v1515
        %v1539 = vunpack.c.l.b16 %v1516
        %v1540 = vunpack.c.l.b16 %v1517
        %v1541 = vunpack.c.l.b16 %v1518
        %v1542 = vunpack.c.l.b16 %v1519
        %v1543 = vpack.c.b16 %v1536, %v1535
        %v1544 = vpack.c.b16 %v1538, %v1537
        %v1545 = vpack.c.b16 %v1540, %v1539
        %v1546 = vpack.c.b16 %v1542, %v1541
        %v1552 = vsel %vm859, %v1511, 0
        %1554 = vmatprep.subr.bf16.mxu0 0
        %1555 = vmatpush1.bf16.msra.mxu0 %v1543
        %1556 = vmatprep.subr.bf16.mxu0 0
        %1557 = vmatpush1.bf16.msra.mxu0 %v1544
        %1558 = vmatprep.subr.bf16.mxu0 0
        %1559 = vmatpush1.bf16.msra.mxu0 %v1545
        %1560 = vmatprep.subr.bf16.mxu0 0
        %1561 = vmatpush1.bf16.msra.mxu0 %v1546
        %1562 = vmatprep.subr.bf16.mxu0 0
        %1563 = vmatpush1.bf16.msra.mxu0 0
        %1564 = vmatprep.subr.bf16.mxu0 0
        %1565 = vmatpush1.bf16.msra.mxu0 0
        %1566 = vmatprep.subr.bf16.mxu0 0
        %1567 = vmatpush1.bf16.msra.mxu0 0
        %1568 = vmatprep.subr.bf16.mxu0 0
        %1569 = vmatpush1.bf16.msra.mxu0 0
        %1570 = vmatprep.subr.bf16.mxu0 0
        %1571 = vmatpush1.bf16.msra.mxu0 0
        %1572 = vmatprep.subr.bf16.mxu0 0
        %1573 = vmatpush1.bf16.msra.mxu0 0
        %1574 = vmatprep.subr.bf16.mxu0 0
        %1575 = vmatpush1.bf16.msra.mxu0 0
        %1576 = vmatprep.subr.bf16.mxu0 0
        %1577 = vmatpush1.bf16.msra.mxu0 0
        %1578 = vmatprep.subr.bf16.mxu0 0
        %1579 = vmatpush1.bf16.msra.mxu0 0
        %1580 = vmatprep.subr.bf16.mxu0 0
        %1581 = vmatpush1.bf16.msra.mxu0 0
        %1582 = vmatprep.subr.bf16.mxu0 0
        %1583 = vmatpush1.bf16.msra.mxu0 0
        %1584 = vmatprep.subr.bf16.mxu0 0
        %1585 = vmatpush1.bf16.msra.mxu0 0
        %1586 = vmatprep.mubr.bf16.mxu0 0
        %1587 = vmatmul.mubr.bf16.gmra.mrb[0].mxu0 %v1552
        %v1588 = vpop.f32.mrb[0].mxu0
        %v1589 = vadd.f32 %v1525, %v1588
        %v1590 = vpop.f32.mrb[0].mxu0
        %v1591 = vpop.f32.mrb[0].mxu0
        %v1592 = vadd.f32 %v1525, %v1591
        %v1593 = vpop.f32.mrb[0].mxu0
        %1594 = vdwg.mxu0
        %v1595 = vmax.f32 %v1589, 0.0
        %v1596 = vmax.f32 %v1592, 0.0
        %v1597 = vand.u32 2147483647, %v680
        %v1598 = vadd.f32 %v1597, 1.0
        %v1599 = vrcp.pop %v1598
        %v1600 = vmul.f32 %v680, %v1599
        %v1601 = vlaneseq
        %v1602 = vshrl.u32 %v1601, 7
        %v1603 = vsub.s32 0, %v1602
        %v1604 = vrot.slane %v1600, %v1603
        %v1605 = vadd.f32 %v1595, %v1604
        %v1606 = vadd.f32 %v1596, %v1604
        %1607 = vst.msk [vmem:[%s584] sm:$0xff] %vm685, %v1605
        %1608 = vst.msk [vmem:[%s584 + $0x8] sm:$0xff] %vm685, %v1606
        %v1609 = vadd.f32 %v1605, %v759
        %v1610 = vadd.f32 %v1606, %v764
        %v1611 = vmul.f32 %v1609, 0.70710677
        %v1612 = vmul.f32 %v1610, 0.70710677
        %1613 = vst.msk [vmem:[%s591] sm:$0xff] %vm685, %v1611
        %1614 = vst.msk [vmem:[%s591 + $0x8] sm:$0xff] %vm685, %v1612
        %s1615 = sand.u32 %s411, 1
        %s1616 = scalar_lea.sflag [#allocation3], %s1615
        %s1617 = sand.u32 %s411, 1
        %s1618 = smul.addr %s1617, 16
        %s1619 = scalar_lea.vmem [#allocation2], %s1618
        %s1620 = sand.u32 %s437, 1
        %s1621 = scalar_lea.sflag [#allocation5], %s1620
        %s1622 = sand.u32 %s437, 1
        %s1623 = smul.addr %s1622, 16
        %s1624 = scalar_lea.vmem [#allocation4], %s1623
        // Predicated region
        $region89: #{encoder_forward.1} parent=87 // pred_check
          %p1625 = pneg %p421
        $region90: #{encoder_forward.1} parent=87 // pred_check_branch
          %1627 = sbr.rel (%p1625) target = $region92
        $region91: #{encoder_forward.1} parent=87 // pred_region
          %s1629 = ssub.s32 256, 256
          %1630 = vsyncadd %s1616, %s1629
          %s1631 = smul.addr %s36, 2
          %s1632 = smul.addr %s1631, 128
          %s1633 = scalar_lea.hbm %s17, %s1632
          %s1634 = sshll.u32 %s1619, 4
          %s1635 = int_to_ptr.vmem [resolvable:$true] %s1634
          %1640 = dma.vmem_to_hbm [thread:$0]  %s1635, 256, %s1633, %s1616, 128, 128, 8
        $region92: #{encoder_forward.1} parent=87 // pred_fallthru
          _
        // Predicated region
        $region93: #{encoder_forward.1} parent=87 // pred_check
          %p1641 = pneg %p447
        $region94: #{encoder_forward.1} parent=87 // pred_check_branch
          %1643 = sbr.rel (%p1641) target = $region96
        $region95: #{encoder_forward.1} parent=87 // pred_region
          %s1645 = ssub.s32 256, 256
          %1646 = vsyncadd %s1621, %s1645
          %s1647 = smul.addr %s36, 2
          %s1648 = smul.addr %s1647, 128
          %s1649 = scalar_lea.hbm %s18, %s1648
          %s1650 = sshll.u32 %s1624, 4
          %s1651 = int_to_ptr.vmem [resolvable:$true] %s1650
          %1656 = dma.vmem_to_hbm [thread:$0]  %s1651, 256, %s1649, %s1621, 128, 128, 8
        $region96: #{encoder_forward.1} parent=87 // pred_fallthru
          _
      $region88: #{encoder_forward.1} parent=5 // pred_fallthru
        _
      %p1657 = scmp.le.s32.totalorder 2, %s31
      // Predicated region
      $region97: #{encoder_forward.1} parent=5 // pred_check
        %p1658 = pneg %p1657
      $region98: #{encoder_forward.1} parent=5 // pred_check_branch
        %1660 = sbr.rel (%p1658) target = $region100
      $region99: #{encoder_forward.1} parent=5 // pred_region
        %s1661 = ssub.s32 %s31, 2
        // Predicated region
        $region101: #{encoder_forward.1} parent=99 // pred_check
          %p1662 = pneg %p427
        $region102: #{encoder_forward.1} parent=99 // pred_check_branch
          %1664 = sbr.rel (%p1662) target = $region104
        $region103: #{encoder_forward.1} parent=99 // pred_region
          %s1665 = sand.u32 %s412, 1
          %s1666 = scalar_lea.sflag [#allocation3], %s1665
          %s1667 = sand.u32 %s412, 1
          %s1668 = smul.addr %s1667, 16
          %s1669 = scalar_lea.vmem [#allocation2], %s1668
          %1670 = dma.done %s1666, 256
        $region104: #{encoder_forward.1} parent=99 // pred_fallthru
          _
        // Predicated region
        $region105: #{encoder_forward.1} parent=99 // pred_check
          %p1671 = pneg %p453
        $region106: #{encoder_forward.1} parent=99 // pred_check_branch
          %1673 = sbr.rel (%p1671) target = $region108
        $region107: #{encoder_forward.1} parent=99 // pred_region
          %s1674 = sand.u32 %s438, 1
          %s1675 = scalar_lea.sflag [#allocation5], %s1674
          %s1676 = sand.u32 %s438, 1
          %s1677 = smul.addr %s1676, 16
          %s1678 = scalar_lea.vmem [#allocation4], %s1677
          %1679 = dma.done %s1675, 256
        $region108: #{encoder_forward.1} parent=99 // pred_fallthru
          _
      $region100: #{encoder_forward.1} parent=5 // pred_fallthru
        _
    $region6: #{encoder_forward.1} parent=1 // loop_footer
      %s35 = sadd.s32 1, %s31
    $region7: #{encoder_forward.1} parent=1 // loop_footer_branch
      %30 = sbr.rel target = $region3
    $region8: #{encoder_forward.1} parent=1 // loop_exit
      _
    %1680 = vsyncpa [#allocation3], 1
    %s1681 = scalar_lea.sflag [#allocation3], 1
    %1682 = vsyncpa %s1681, 1
    %1683 = vsyncpa [#allocation5], 1
    %s1684 = scalar_lea.sflag [#allocation5], 1
    %1685 = vsyncpa %s1684, 1

</llo_original>
